<compile_context>
chip_gen: v6e
topology: v6e:2x2x1
jax: 0.10.0
libtpu: 0.0.40
codegen_flags: <defaults>
</compile_context>

<pallas_src>
import jax
import jax.numpy as jnp
from jax import lax
from jax.experimental import pallas as pl
from jax.experimental.pallas import tpu as pltpu

K = 7     # conv kernel size
PAD = 3   # padding (same as nn.Conv2d(2, 1, kernel_size=7, padding=3))


def _spatial_attention_kernel(x_ref, w_ref, b_ref, o_ref, base_ref, shift_ref):
    # x_ref:     (Bt, C, H, W)          VMEM input block
    # w_ref:     (2*K*K,)               SMEM flattened OIHW conv weight (O == 1)
    # b_ref:     (1,)                   SMEM conv bias
    # o_ref:     (1, H, L)              VMEM lane-packed output block, L = Bt*W
    # base_ref:  (2, Hp, L + 2*PAD)     VMEM padded 2-channel feature planes
    # shift_ref: (2*K, Hp, L)           VMEM pre-shifted + masked planes
    Bt, C, H, W = x_ref.shape
    L = Bt * W
    Hp = H + 2 * PAD
    Lp = L + 2 * PAD
    f32 = jnp.float32

    # ---- channel mean / max, channel-by-channel (no full f32 copy of the tile).
    x0 = x_ref[:, 0]                       # (Bt, H, W)
    s = x0.astype(f32)
    m = x0
    for c in range(1, C):
        xc = x_ref[:, c]
        s = s + xc.astype(f32)
        m = jnp.maximum(m, xc)
    avg = s * (1.0 / C)                    # (Bt, H, W) f32
    mx = m.astype(f32)                     # (Bt, H, W) f32

    # ---- zero only the halo of the base planes (vertical pad rows + horizontal
    #      pad lanes).  The interior is fully overwritten every step, so doing
    #      this each step stays correct under megacore sharding of the batch
    #      axis (per-core scratch).
    base_ref[:, 0:PAD, :] = jnp.zeros((2, PAD, Lp), f32)
    base_ref[:, PAD + H:Hp, :] = jnp.zeros((2, PAD, Lp), f32)
    base_ref[:, PAD:PAD + H, 0:PAD] = jnp.zeros((2, H, PAD), f32)
    base_ref[:, PAD:PAD + H, PAD + L:Lp] = jnp.zeros((2, H, PAD), f32)

    # ---- lane-pack the Bt images side by side in the padded planes.
    for b in range(Bt):
        lo = PAD + b * W
        base_ref[0, PAD:PAD + H, lo:lo + W] = avg[b]
        base_ref[1, PAD:PAD + H, lo:lo + W] = mx[b]

    # ---- build the 2*K pre-shifted, cross-image-masked planes (one per (c, kw)).
    #      plane[:, l] = base[:, l + kw]; lane l = b*W + w of the output needs
    #      padded-input column (w + kw) of image b, which sits at base lane
    #      PAD + b*W + (w + kw - PAD) = l + kw.  The validity mask zeroes lanes
    #      where w + kw - PAD falls outside [0, W) (bleed from the neighbouring
    #      lane-packed image); with a single image the zero halos already cover it.
    col = lax.broadcasted_iota(jnp.int32, (Hp, L), 1) % W
    for c in range(2):
        for kw in range(K):
            plane = base_ref[c, :, kw:kw + L]          # (Hp, L) lane-offset read
            d = kw - PAD
            if d != 0 and Bt > 1:
                valid = jnp.logical_and(col + d >= 0, col + d < W)
                plane = jnp.where(valid, plane, 0.0)
            shift_ref[c * K + kw] = plane

    # ---- 7x7 conv, 2 in-ch -> 1 out-ch: 98 scalar(SMEM) * vector MACs over
    #      (H, L) tiles.  Every tap operand is a plain sublane-offset VMEM load
    #      from shift_ref; 4 independent accumulators (2 vregs each at L = 128)
    #      give ILP without blowing the 64-vreg file.
    accs = [jnp.zeros((H, L), f32) for _ in range(4)]
    t = 0
    for c in range(2):
        for kw in range(K):
            for kh in range(K):
                w_s = w_ref[c * K * K + kh * K + kw]       # scalar from SMEM
                tap = shift_ref[c * K + kw, kh:kh + H, :]  # (H, L)
                accs[t % 4] = accs[t % 4] + w_s * tap
                t += 1

    res = (accs[0] + accs[1]) + (accs[2] + accs[3]) + b_ref[0]
    o_ref[0] = jax.nn.sigmoid(res).astype(o_ref.dtype)    # lane-dense store


def _largest_divisor_leq(n, cap):
    for bt in range(min(n, cap), 0, -1):
        if n % bt == 0:
            return bt
    return 1


def _pick_batch_tile(n, w):
    # Fill one 128-lane vreg row with images (128 // W of them), but cap at
    # max(1, N // 2) so the batch grid has >= 2 steps whenever N >= 2 and both
    # v7x TensorCores get work.
    lane_cap = max(1, 128 // w) if w <= 128 else 1
    cap = min(lane_cap, max(1, n // 2)) if n >= 2 else 1
    return _largest_divisor_leq(n, max(1, cap))


def spatial_attention(x, weight, bias):
    """x: (N, C, H, W); weight: (1, 2, K, K); bias: (1,). Returns (N, 1, H, W)."""
    N, C, H, W = x.shape
    assert weight.shape == (1, 2, K, K), weight.shape
    w_flat = weight.astype(jnp.float32).reshape(2 * K * K)
    b = bias.astype(jnp.float32).reshape(1)

    Bt = _pick_batch_tile(N, W)            # images per grid step (lane-packed)
    G = N // Bt
    L = Bt * W
    Hp = H + 2 * PAD

    cost = pl.CostEstimate(
        flops=int(N * H * W * (2 * 2 * K * K) + N * C * H * W * 2),
        transcendentals=int(N * H * W),
        bytes_accessed=int(x.size * x.dtype.itemsize + w_flat.size * 4
                           + b.size * 4 + N * H * W * x.dtype.itemsize))

    out_packed = pl.pallas_call(
        _spatial_attention_kernel,
        out_shape=jax.ShapeDtypeStruct((G, H, L), x.dtype),
        grid=(G,),
        in_specs=[
            pl.BlockSpec((Bt, C, H, W), lambda n: (n, 0, 0, 0)),
            pl.BlockSpec(memory_space=pltpu.MemorySpace.SMEM),   # weights
            pl.BlockSpec(memory_space=pltpu.MemorySpace.SMEM),   # bias
        ],
        out_specs=pl.BlockSpec((1, H, L), lambda n: (n, 0, 0)),
        scratch_shapes=[
            pltpu.VMEM((2, Hp, L + 2 * PAD), jnp.float32),       # padded planes
            pltpu.VMEM((2 * K, Hp, L), jnp.float32),             # shifted planes
        ],
        compiler_params=pltpu.CompilerParams(
            dimension_semantics=("parallel",),
            vmem_limit_bytes=32 * 1024 * 1024),
        cost_estimate=cost,
    )(x, w_flat, b)

    # Un-pack the lane-packed (G, H, Bt*W) slab back to NCHW.
    out = out_packed.reshape(G, H, Bt, W).transpose(0, 2, 1, 3)
    return out.reshape(N, 1, H, W)


def spatial_attention_reference(x, weight, bias):
    """Pure-JAX reference matching the PyTorch module."""
    avg = jnp.mean(x, axis=1, keepdims=True)
    mx = jnp.max(x, axis=1, keepdims=True)
    feat = jnp.concatenate([avg, mx], axis=1)             # (N, 2, H, W)
    out = jax.lax.conv_general_dilated(
        feat, weight, window_strides=(1, 1),
        padding=((PAD, PAD), (PAD, PAD)),
        dimension_numbers=("NCHW", "OIHW", "NCHW"))
    out = out + bias.reshape(1, 1, 1, 1)
    return jax.nn.sigmoid(out)


if __name__ == "__main__":
    key = jax.random.PRNGKey(0)
    kx, kw_, kb = jax.random.split(key, 3)

    N, C, H, W = 2, 4, 16, 16
    x = jax.random.normal(kx, (N, C, H, W), dtype=jnp.float32)

    # Deterministic synthetic parameters for nn.Conv2d(2, 1, 7, padding=3).
    weight = 0.1 * jax.random.normal(kw_, (1, 2, K, K), dtype=jnp.float32)
    bias = 0.05 * jax.random.normal(kb, (1,), dtype=jnp.float32)

    out = jax.block_until_ready(spatial_attention(x, weight, bias))
    ref = jax.block_until_ready(spatial_attention_reference(x, weight, bias))

    assert out.shape == (N, 1, H, W), out.shape
    err = jnp.max(jnp.abs(out - ref))
    assert jnp.allclose(out, ref, rtol=1e-5, atol=1e-5), f"max abs err = {err}"

    print("KERNEL_OK")
</pallas_src>

<mosaic_0001>
module attributes {stable_mosaic.version = 11 : i64} {
  func.func @_spatial_attention_kernel(%arg0: i32, %arg1: memref<1x4x16x16xf32, #tpu.memory_space<vmem>>, %arg2: memref<98xf32, #tpu.memory_space<smem>>, %arg3: memref<1xf32, #tpu.memory_space<smem>>, %arg4: memref<1x16x16xf32, #tpu.memory_space<vmem>>, %arg5: memref<2x22x22xf32, #tpu.memory_space<vmem>>, %arg6: memref<14x22x16xf32, #tpu.memory_space<vmem>>) attributes {dimension_semantics = [#tpu.dimension_semantics<parallel>], iteration_bounds = array<i64: 2>, scalar_prefetch = 0 : i64, scratch_operands = 2 : i64, tpu.core_type = #tpu.core_type<tc>, window_params = [{transform_indices = @transform_0, window_bounds = array<i64: 1, 4, 16, 16>}, {transform_indices = @transform_1, window_bounds = array<i64: 98>}, {transform_indices = @transform_2, window_bounds = array<i64: 1>}, {transform_indices = @transform_3, window_bounds = array<i64: 1, 16, 16>}]} {
    %c0 = arith.constant 0 : index
    %c0_0 = arith.constant 0 : index
    %c0_1 = arith.constant 0 : index
    %c0_2 = arith.constant 0 : index
    %0 = vector.load %arg1[%c0, %c0_0, %c0_1, %c0_2] : memref<1x4x16x16xf32, #tpu.memory_space<vmem>>, vector<1x1x16x16xf32>
    %1 = vector.shape_cast %0 : vector<1x1x16x16xf32> to vector<1x16x16xf32>
    %c0_3 = arith.constant 0 : index
    %c1 = arith.constant 1 : index
    %c0_4 = arith.constant 0 : index
    %c0_5 = arith.constant 0 : index
    %2 = vector.load %arg1[%c0_3, %c1, %c0_4, %c0_5] : memref<1x4x16x16xf32, #tpu.memory_space<vmem>>, vector<1x1x16x16xf32>
    %3 = vector.shape_cast %2 : vector<1x1x16x16xf32> to vector<1x16x16xf32>
    %4 = arith.addf %1, %3 : vector<1x16x16xf32>
    %5 = arith.maximumf %1, %3 : vector<1x16x16xf32>
    %c0_6 = arith.constant 0 : index
    %c2 = arith.constant 2 : index
    %c0_7 = arith.constant 0 : index
    %c0_8 = arith.constant 0 : index
    %6 = vector.load %arg1[%c0_6, %c2, %c0_7, %c0_8] : memref<1x4x16x16xf32, #tpu.memory_space<vmem>>, vector<1x1x16x16xf32>
    %7 = vector.shape_cast %6 : vector<1x1x16x16xf32> to vector<1x16x16xf32>
    %8 = arith.addf %4, %7 : vector<1x16x16xf32>
    %9 = arith.maximumf %5, %7 : vector<1x16x16xf32>
    %c0_9 = arith.constant 0 : index
    %c3 = arith.constant 3 : index
    %c0_10 = arith.constant 0 : index
    %c0_11 = arith.constant 0 : index
    %10 = vector.load %arg1[%c0_9, %c3, %c0_10, %c0_11] : memref<1x4x16x16xf32, #tpu.memory_space<vmem>>, vector<1x1x16x16xf32>
    %11 = vector.shape_cast %10 : vector<1x1x16x16xf32> to vector<1x16x16xf32>
    %12 = arith.addf %8, %11 : vector<1x16x16xf32>
    %13 = arith.maximumf %9, %11 : vector<1x16x16xf32>
    %cst = arith.constant 2.500000e-01 : f32
    %14 = vector.broadcast %cst : f32 to vector<1x16x16xf32>
    %15 = arith.mulf %12, %14 : vector<1x16x16xf32>
    %cst_12 = arith.constant 0.000000e+00 : f32
    %16 = vector.broadcast %cst_12 : f32 to vector<2x3x22xf32>
    %c0_13 = arith.constant 0 : index
    %c0_14 = arith.constant 0 : index
    %c0_15 = arith.constant 0 : index
    %17 = vector.load %arg5[%c0_13, %c0_14, %c0_15] : memref<2x22x22xf32, #tpu.memory_space<vmem>>, vector<2x3x22xf32>
    tpu.vector_store %arg5[%c0_13, %c0_14, %c0_15], %16 {strides = array<i32>} : memref<2x22x22xf32, #tpu.memory_space<vmem>>, vector<2x3x22xf32>,
    %cst_16 = arith.constant 0.000000e+00 : f32
    %18 = vector.broadcast %cst_16 : f32 to vector<2x3x22xf32>
    %c0_17 = arith.constant 0 : index
    %c19 = arith.constant 19 : index
    %c0_18 = arith.constant 0 : index
    %19 = vector.load %arg5[%c0_17, %c19, %c0_18] : memref<2x22x22xf32, #tpu.memory_space<vmem>>, vector<2x3x22xf32>
    tpu.vector_store %arg5[%c0_17, %c19, %c0_18], %18 {strides = array<i32>} : memref<2x22x22xf32, #tpu.memory_space<vmem>>, vector<2x3x22xf32>,
    %cst_19 = arith.constant 0.000000e+00 : f32
    %20 = vector.broadcast %cst_19 : f32 to vector<2x16x3xf32>
    %c0_20 = arith.constant 0 : index
    %c3_21 = arith.constant 3 : index
    %c0_22 = arith.constant 0 : index
    %21 = vector.load %arg5[%c0_20, %c3_21, %c0_22] : memref<2x22x22xf32, #tpu.memory_space<vmem>>, vector<2x16x3xf32>
    tpu.vector_store %arg5[%c0_20, %c3_21, %c0_22], %20 {strides = array<i32>} : memref<2x22x22xf32, #tpu.memory_space<vmem>>, vector<2x16x3xf32>,
    %cst_23 = arith.constant 0.000000e+00 : f32
    %22 = vector.broadcast %cst_23 : f32 to vector<2x16x3xf32>
    %c0_24 = arith.constant 0 : index
    %c3_25 = arith.constant 3 : index
    %c19_26 = arith.constant 19 : index
    %23 = vector.load %arg5[%c0_24, %c3_25, %c19_26] : memref<2x22x22xf32, #tpu.memory_space<vmem>>, vector<2x16x3xf32>
    tpu.vector_store %arg5[%c0_24, %c3_25, %c19_26], %22 {strides = array<i32>} : memref<2x22x22xf32, #tpu.memory_space<vmem>>, vector<2x16x3xf32>,
    %24 = vector.shape_cast %15 : vector<1x16x16xf32> to vector<16x16xf32>
    %c0_27 = arith.constant 0 : index
    %c3_28 = arith.constant 3 : index
    %c3_29 = arith.constant 3 : index
    %25 = vector.load %arg5[%c0_27, %c3_28, %c3_29] : memref<2x22x22xf32, #tpu.memory_space<vmem>>, vector<1x16x16xf32>
    %26 = vector.shape_cast %25 : vector<1x16x16xf32> to vector<16x16xf32>
    %27 = vector.shape_cast %24 : vector<16x16xf32> to vector<1x16x16xf32>
    tpu.vector_store %arg5[%c0_27, %c3_28, %c3_29], %27 {strides = array<i32>} : memref<2x22x22xf32, #tpu.memory_space<vmem>>, vector<1x16x16xf32>,
    %28 = vector.shape_cast %13 : vector<1x16x16xf32> to vector<16x16xf32>
    %c1_30 = arith.constant 1 : index
    %c3_31 = arith.constant 3 : index
    %c3_32 = arith.constant 3 : index
    %29 = vector.load %arg5[%c1_30, %c3_31, %c3_32] : memref<2x22x22xf32, #tpu.memory_space<vmem>>, vector<1x16x16xf32>
    %30 = vector.shape_cast %29 : vector<1x16x16xf32> to vector<16x16xf32>
    %31 = vector.shape_cast %28 : vector<16x16xf32> to vector<1x16x16xf32>
    tpu.vector_store %arg5[%c1_30, %c3_31, %c3_32], %31 {strides = array<i32>} : memref<2x22x22xf32, #tpu.memory_space<vmem>>, vector<1x16x16xf32>,
    %c0_33 = arith.constant 0 : index
    %c0_34 = arith.constant 0 : index
    %c0_35 = arith.constant 0 : index
    %32 = vector.load %arg5[%c0_33, %c0_34, %c0_35] : memref<2x22x22xf32, #tpu.memory_space<vmem>>, vector<1x22x16xf32>
    %33 = vector.shape_cast %32 : vector<1x22x16xf32> to vector<22x16xf32>
    %c0_36 = arith.constant 0 : index
    %c0_37 = arith.constant 0 : index
    %c0_38 = arith.constant 0 : index
    %34 = vector.load %arg6[%c0_36, %c0_37, %c0_38] : memref<14x22x16xf32, #tpu.memory_space<vmem>>, vector<1x22x16xf32>
    %35 = vector.shape_cast %34 : vector<1x22x16xf32> to vector<22x16xf32>
    %36 = vector.shape_cast %33 : vector<22x16xf32> to vector<1x22x16xf32>
    tpu.vector_store %arg6[%c0_36, %c0_37, %c0_38], %36 {strides = array<i32>} : memref<14x22x16xf32, #tpu.memory_space<vmem>>, vector<1x22x16xf32>,
    %c0_39 = arith.constant 0 : index
    %c0_40 = arith.constant 0 : index
    %c1_41 = arith.constant 1 : index
    %37 = vector.load %arg5[%c0_39, %c0_40, %c1_41] : memref<2x22x22xf32, #tpu.memory_space<vmem>>, vector<1x22x16xf32>
    %38 = vector.shape_cast %37 : vector<1x22x16xf32> to vector<22x16xf32>
    %c1_42 = arith.constant 1 : index
    %c0_43 = arith.constant 0 : index
    %c0_44 = arith.constant 0 : index
    %39 = vector.load %arg6[%c1_42, %c0_43, %c0_44] : memref<14x22x16xf32, #tpu.memory_space<vmem>>, vector<1x22x16xf32>
    %40 = vector.shape_cast %39 : vector<1x22x16xf32> to vector<22x16xf32>
    %41 = vector.shape_cast %38 : vector<22x16xf32> to vector<1x22x16xf32>
    tpu.vector_store %arg6[%c1_42, %c0_43, %c0_44], %41 {strides = array<i32>} : memref<14x22x16xf32, #tpu.memory_space<vmem>>, vector<1x22x16xf32>,
    %c0_45 = arith.constant 0 : index
    %c0_46 = arith.constant 0 : index
    %c2_47 = arith.constant 2 : index
    %42 = vector.load %arg5[%c0_45, %c0_46, %c2_47] : memref<2x22x22xf32, #tpu.memory_space<vmem>>, vector<1x22x16xf32>
    %43 = vector.shape_cast %42 : vector<1x22x16xf32> to vector<22x16xf32>
    %c2_48 = arith.constant 2 : index
    %c0_49 = arith.constant 0 : index
    %c0_50 = arith.constant 0 : index
    %44 = vector.load %arg6[%c2_48, %c0_49, %c0_50] : memref<14x22x16xf32, #tpu.memory_space<vmem>>, vector<1x22x16xf32>
    %45 = vector.shape_cast %44 : vector<1x22x16xf32> to vector<22x16xf32>
    %46 = vector.shape_cast %43 : vector<22x16xf32> to vector<1x22x16xf32>
    tpu.vector_store %arg6[%c2_48, %c0_49, %c0_50], %46 {strides = array<i32>} : memref<14x22x16xf32, #tpu.memory_space<vmem>>, vector<1x22x16xf32>,
    %c0_51 = arith.constant 0 : index
    %c0_52 = arith.constant 0 : index
    %c3_53 = arith.constant 3 : index
    %47 = vector.load %arg5[%c0_51, %c0_52, %c3_53] : memref<2x22x22xf32, #tpu.memory_space<vmem>>, vector<1x22x16xf32>
    %48 = vector.shape_cast %47 : vector<1x22x16xf32> to vector<22x16xf32>
    %c3_54 = arith.constant 3 : index
    %c0_55 = arith.constant 0 : index
    %c0_56 = arith.constant 0 : index
    %49 = vector.load %arg6[%c3_54, %c0_55, %c0_56] : memref<14x22x16xf32, #tpu.memory_space<vmem>>, vector<1x22x16xf32>
    %50 = vector.shape_cast %49 : vector<1x22x16xf32> to vector<22x16xf32>
    %51 = vector.shape_cast %48 : vector<22x16xf32> to vector<1x22x16xf32>
    tpu.vector_store %arg6[%c3_54, %c0_55, %c0_56], %51 {strides = array<i32>} : memref<14x22x16xf32, #tpu.memory_space<vmem>>, vector<1x22x16xf32>,
    %c0_57 = arith.constant 0 : index
    %c0_58 = arith.constant 0 : index
    %c4 = arith.constant 4 : index
    %52 = vector.load %arg5[%c0_57, %c0_58, %c4] : memref<2x22x22xf32, #tpu.memory_space<vmem>>, vector<1x22x16xf32>
    %53 = vector.shape_cast %52 : vector<1x22x16xf32> to vector<22x16xf32>
    %c4_59 = arith.constant 4 : index
    %c0_60 = arith.constant 0 : index
    %c0_61 = arith.constant 0 : index
    %54 = vector.load %arg6[%c4_59, %c0_60, %c0_61] : memref<14x22x16xf32, #tpu.memory_space<vmem>>, vector<1x22x16xf32>
    %55 = vector.shape_cast %54 : vector<1x22x16xf32> to vector<22x16xf32>
    %56 = vector.shape_cast %53 : vector<22x16xf32> to vector<1x22x16xf32>
    tpu.vector_store %arg6[%c4_59, %c0_60, %c0_61], %56 {strides = array<i32>} : memref<14x22x16xf32, #tpu.memory_space<vmem>>, vector<1x22x16xf32>,
    %c0_62 = arith.constant 0 : index
    %c0_63 = arith.constant 0 : index
    %c5 = arith.constant 5 : index
    %57 = vector.load %arg5[%c0_62, %c0_63, %c5] : memref<2x22x22xf32, #tpu.memory_space<vmem>>, vector<1x22x16xf32>
    %58 = vector.shape_cast %57 : vector<1x22x16xf32> to vector<22x16xf32>
    %c5_64 = arith.constant 5 : index
    %c0_65 = arith.constant 0 : index
    %c0_66 = arith.constant 0 : index
    %59 = vector.load %arg6[%c5_64, %c0_65, %c0_66] : memref<14x22x16xf32, #tpu.memory_space<vmem>>, vector<1x22x16xf32>
    %60 = vector.shape_cast %59 : vector<1x22x16xf32> to vector<22x16xf32>
    %61 = vector.shape_cast %58 : vector<22x16xf32> to vector<1x22x16xf32>
    tpu.vector_store %arg6[%c5_64, %c0_65, %c0_66], %61 {strides = array<i32>} : memref<14x22x16xf32, #tpu.memory_space<vmem>>, vector<1x22x16xf32>,
    %c0_67 = arith.constant 0 : index
    %c0_68 = arith.constant 0 : index
    %c6 = arith.constant 6 : index
    %62 = vector.load %arg5[%c0_67, %c0_68, %c6] : memref<2x22x22xf32, #tpu.memory_space<vmem>>, vector<1x22x16xf32>
    %63 = vector.shape_cast %62 : vector<1x22x16xf32> to vector<22x16xf32>
    %c6_69 = arith.constant 6 : index
    %c0_70 = arith.constant 0 : index
    %c0_71 = arith.constant 0 : index
    %64 = vector.load %arg6[%c6_69, %c0_70, %c0_71] : memref<14x22x16xf32, #tpu.memory_space<vmem>>, vector<1x22x16xf32>
    %65 = vector.shape_cast %64 : vector<1x22x16xf32> to vector<22x16xf32>
    %66 = vector.shape_cast %63 : vector<22x16xf32> to vector<1x22x16xf32>
    tpu.vector_store %arg6[%c6_69, %c0_70, %c0_71], %66 {strides = array<i32>} : memref<14x22x16xf32, #tpu.memory_space<vmem>>, vector<1x22x16xf32>,
    %c1_72 = arith.constant 1 : index
    %c0_73 = arith.constant 0 : index
    %c0_74 = arith.constant 0 : index
    %67 = vector.load %arg5[%c1_72, %c0_73, %c0_74] : memref<2x22x22xf32, #tpu.memory_space<vmem>>, vector<1x22x16xf32>
    %68 = vector.shape_cast %67 : vector<1x22x16xf32> to vector<22x16xf32>
    %c7 = arith.constant 7 : index
    %c0_75 = arith.constant 0 : index
    %c0_76 = arith.constant 0 : index
    %69 = vector.load %arg6[%c7, %c0_75, %c0_76] : memref<14x22x16xf32, #tpu.memory_space<vmem>>, vector<1x22x16xf32>
    %70 = vector.shape_cast %69 : vector<1x22x16xf32> to vector<22x16xf32>
    %71 = vector.shape_cast %68 : vector<22x16xf32> to vector<1x22x16xf32>
    tpu.vector_store %arg6[%c7, %c0_75, %c0_76], %71 {strides = array<i32>} : memref<14x22x16xf32, #tpu.memory_space<vmem>>, vector<1x22x16xf32>,
    %c1_77 = arith.constant 1 : index
    %c0_78 = arith.constant 0 : index
    %c1_79 = arith.constant 1 : index
    %72 = vector.load %arg5[%c1_77, %c0_78, %c1_79] : memref<2x22x22xf32, #tpu.memory_space<vmem>>, vector<1x22x16xf32>
    %73 = vector.shape_cast %72 : vector<1x22x16xf32> to vector<22x16xf32>
    %c8 = arith.constant 8 : index
    %c0_80 = arith.constant 0 : index
    %c0_81 = arith.constant 0 : index
    %74 = vector.load %arg6[%c8, %c0_80, %c0_81] : memref<14x22x16xf32, #tpu.memory_space<vmem>>, vector<1x22x16xf32>
    %75 = vector.shape_cast %74 : vector<1x22x16xf32> to vector<22x16xf32>
    %76 = vector.shape_cast %73 : vector<22x16xf32> to vector<1x22x16xf32>
    tpu.vector_store %arg6[%c8, %c0_80, %c0_81], %76 {strides = array<i32>} : memref<14x22x16xf32, #tpu.memory_space<vmem>>, vector<1x22x16xf32>,
    %c1_82 = arith.constant 1 : index
    %c0_83 = arith.constant 0 : index
    %c2_84 = arith.constant 2 : index
    %77 = vector.load %arg5[%c1_82, %c0_83, %c2_84] : memref<2x22x22xf32, #tpu.memory_space<vmem>>, vector<1x22x16xf32>
    %78 = vector.shape_cast %77 : vector<1x22x16xf32> to vector<22x16xf32>
    %c9 = arith.constant 9 : index
    %c0_85 = arith.constant 0 : index
    %c0_86 = arith.constant 0 : index
    %79 = vector.load %arg6[%c9, %c0_85, %c0_86] : memref<14x22x16xf32, #tpu.memory_space<vmem>>, vector<1x22x16xf32>
    %80 = vector.shape_cast %79 : vector<1x22x16xf32> to vector<22x16xf32>
    %81 = vector.shape_cast %78 : vector<22x16xf32> to vector<1x22x16xf32>
    tpu.vector_store %arg6[%c9, %c0_85, %c0_86], %81 {strides = array<i32>} : memref<14x22x16xf32, #tpu.memory_space<vmem>>, vector<1x22x16xf32>,
    %c1_87 = arith.constant 1 : index
    %c0_88 = arith.constant 0 : index
    %c3_89 = arith.constant 3 : index
    %82 = vector.load %arg5[%c1_87, %c0_88, %c3_89] : memref<2x22x22xf32, #tpu.memory_space<vmem>>, vector<1x22x16xf32>
    %83 = vector.shape_cast %82 : vector<1x22x16xf32> to vector<22x16xf32>
    %c10 = arith.constant 10 : index
    %c0_90 = arith.constant 0 : index
    %c0_91 = arith.constant 0 : index
    %84 = vector.load %arg6[%c10, %c0_90, %c0_91] : memref<14x22x16xf32, #tpu.memory_space<vmem>>, vector<1x22x16xf32>
    %85 = vector.shape_cast %84 : vector<1x22x16xf32> to vector<22x16xf32>
    %86 = vector.shape_cast %83 : vector<22x16xf32> to vector<1x22x16xf32>
    tpu.vector_store %arg6[%c10, %c0_90, %c0_91], %86 {strides = array<i32>} : memref<14x22x16xf32, #tpu.memory_space<vmem>>, vector<1x22x16xf32>,
    %c1_92 = arith.constant 1 : index
    %c0_93 = arith.constant 0 : index
    %c4_94 = arith.constant 4 : index
    %87 = vector.load %arg5[%c1_92, %c0_93, %c4_94] : memref<2x22x22xf32, #tpu.memory_space<vmem>>, vector<1x22x16xf32>
    %88 = vector.shape_cast %87 : vector<1x22x16xf32> to vector<22x16xf32>
    %c11 = arith.constant 11 : index
    %c0_95 = arith.constant 0 : index
    %c0_96 = arith.constant 0 : index
    %89 = vector.load %arg6[%c11, %c0_95, %c0_96] : memref<14x22x16xf32, #tpu.memory_space<vmem>>, vector<1x22x16xf32>
    %90 = vector.shape_cast %89 : vector<1x22x16xf32> to vector<22x16xf32>
    %91 = vector.shape_cast %88 : vector<22x16xf32> to vector<1x22x16xf32>
    tpu.vector_store %arg6[%c11, %c0_95, %c0_96], %91 {strides = array<i32>} : memref<14x22x16xf32, #tpu.memory_space<vmem>>, vector<1x22x16xf32>,
    %c1_97 = arith.constant 1 : index
    %c0_98 = arith.constant 0 : index
    %c5_99 = arith.constant 5 : index
    %92 = vector.load %arg5[%c1_97, %c0_98, %c5_99] : memref<2x22x22xf32, #tpu.memory_space<vmem>>, vector<1x22x16xf32>
    %93 = vector.shape_cast %92 : vector<1x22x16xf32> to vector<22x16xf32>
    %c12 = arith.constant 12 : index
    %c0_100 = arith.constant 0 : index
    %c0_101 = arith.constant 0 : index
    %94 = vector.load %arg6[%c12, %c0_100, %c0_101] : memref<14x22x16xf32, #tpu.memory_space<vmem>>, vector<1x22x16xf32>
    %95 = vector.shape_cast %94 : vector<1x22x16xf32> to vector<22x16xf32>
    %96 = vector.shape_cast %93 : vector<22x16xf32> to vector<1x22x16xf32>
    tpu.vector_store %arg6[%c12, %c0_100, %c0_101], %96 {strides = array<i32>} : memref<14x22x16xf32, #tpu.memory_space<vmem>>, vector<1x22x16xf32>,
    %c1_102 = arith.constant 1 : index
    %c0_103 = arith.constant 0 : index
    %c6_104 = arith.constant 6 : index
    %97 = vector.load %arg5[%c1_102, %c0_103, %c6_104] : memref<2x22x22xf32, #tpu.memory_space<vmem>>, vector<1x22x16xf32>
    %98 = vector.shape_cast %97 : vector<1x22x16xf32> to vector<22x16xf32>
    %c13 = arith.constant 13 : index
    %c0_105 = arith.constant 0 : index
    %c0_106 = arith.constant 0 : index
    %99 = vector.load %arg6[%c13, %c0_105, %c0_106] : memref<14x22x16xf32, #tpu.memory_space<vmem>>, vector<1x22x16xf32>
    %100 = vector.shape_cast %99 : vector<1x22x16xf32> to vector<22x16xf32>
    %101 = vector.shape_cast %98 : vector<22x16xf32> to vector<1x22x16xf32>
    tpu.vector_store %arg6[%c13, %c0_105, %c0_106], %101 {strides = array<i32>} : memref<14x22x16xf32, #tpu.memory_space<vmem>>, vector<1x22x16xf32>,
    %cst_107 = arith.constant 0.000000e+00 : f32
    %102 = vector.broadcast %cst_107 : f32 to vector<16x16xf32>
    %cst_108 = arith.constant 0.000000e+00 : f32
    %103 = vector.broadcast %cst_108 : f32 to vector<16x16xf32>
    %cst_109 = arith.constant 0.000000e+00 : f32
    %104 = vector.broadcast %cst_109 : f32 to vector<16x16xf32>
    %cst_110 = arith.constant 0.000000e+00 : f32
    %105 = vector.broadcast %cst_110 : f32 to vector<16x16xf32>
    %c0_111 = arith.constant 0 : index
    %106 = memref.load %arg2[%c0_111] : memref<98xf32, #tpu.memory_space<smem>>
    %c0_112 = arith.constant 0 : index
    %c0_113 = arith.constant 0 : index
    %c0_114 = arith.constant 0 : index
    %107 = vector.load %arg6[%c0_112, %c0_113, %c0_114] : memref<14x22x16xf32, #tpu.memory_space<vmem>>, vector<1x16x16xf32>
    %108 = vector.shape_cast %107 : vector<1x16x16xf32> to vector<16x16xf32>
    %109 = vector.broadcast %106 : f32 to vector<16x16xf32>
    %110 = arith.mulf %109, %108 : vector<16x16xf32>
    %111 = arith.addf %102, %110 : vector<16x16xf32>
    %c7_115 = arith.constant 7 : index
    %112 = memref.load %arg2[%c7_115] : memref<98xf32, #tpu.memory_space<smem>>
    %c0_116 = arith.constant 0 : index
    %c1_117 = arith.constant 1 : index
    %c0_118 = arith.constant 0 : index
    %113 = vector.load %arg6[%c0_116, %c1_117, %c0_118] : memref<14x22x16xf32, #tpu.memory_space<vmem>>, vector<1x16x16xf32>
    %114 = vector.shape_cast %113 : vector<1x16x16xf32> to vector<16x16xf32>
    %115 = vector.broadcast %112 : f32 to vector<16x16xf32>
    %116 = arith.mulf %115, %114 : vector<16x16xf32>
    %117 = arith.addf %103, %116 : vector<16x16xf32>
    %c14 = arith.constant 14 : index
    %118 = memref.load %arg2[%c14] : memref<98xf32, #tpu.memory_space<smem>>
    %c0_119 = arith.constant 0 : index
    %c2_120 = arith.constant 2 : index
    %c0_121 = arith.constant 0 : index
    %119 = vector.load %arg6[%c0_119, %c2_120, %c0_121] : memref<14x22x16xf32, #tpu.memory_space<vmem>>, vector<1x16x16xf32>
    %120 = vector.shape_cast %119 : vector<1x16x16xf32> to vector<16x16xf32>
    %121 = vector.broadcast %118 : f32 to vector<16x16xf32>
    %122 = arith.mulf %121, %120 : vector<16x16xf32>
    %123 = arith.addf %104, %122 : vector<16x16xf32>
    %c21 = arith.constant 21 : index
    %124 = memref.load %arg2[%c21] : memref<98xf32, #tpu.memory_space<smem>>
    %c0_122 = arith.constant 0 : index
    %c3_123 = arith.constant 3 : index
    %c0_124 = arith.constant 0 : index
    %125 = vector.load %arg6[%c0_122, %c3_123, %c0_124] : memref<14x22x16xf32, #tpu.memory_space<vmem>>, vector<1x16x16xf32>
    %126 = vector.shape_cast %125 : vector<1x16x16xf32> to vector<16x16xf32>
    %127 = vector.broadcast %124 : f32 to vector<16x16xf32>
    %128 = arith.mulf %127, %126 : vector<16x16xf32>
    %129 = arith.addf %105, %128 : vector<16x16xf32>
    %c28 = arith.constant 28 : index
    %130 = memref.load %arg2[%c28] : memref<98xf32, #tpu.memory_space<smem>>
    %c0_125 = arith.constant 0 : index
    %c4_126 = arith.constant 4 : index
    %c0_127 = arith.constant 0 : index
    %131 = vector.load %arg6[%c0_125, %c4_126, %c0_127] : memref<14x22x16xf32, #tpu.memory_space<vmem>>, vector<1x16x16xf32>
    %132 = vector.shape_cast %131 : vector<1x16x16xf32> to vector<16x16xf32>
    %133 = vector.broadcast %130 : f32 to vector<16x16xf32>
    %134 = arith.mulf %133, %132 : vector<16x16xf32>
    %135 = arith.addf %111, %134 : vector<16x16xf32>
    %c35 = arith.constant 35 : index
    %136 = memref.load %arg2[%c35] : memref<98xf32, #tpu.memory_space<smem>>
    %c0_128 = arith.constant 0 : index
    %c5_129 = arith.constant 5 : index
    %c0_130 = arith.constant 0 : index
    %137 = vector.load %arg6[%c0_128, %c5_129, %c0_130] : memref<14x22x16xf32, #tpu.memory_space<vmem>>, vector<1x16x16xf32>
    %138 = vector.shape_cast %137 : vector<1x16x16xf32> to vector<16x16xf32>
    %139 = vector.broadcast %136 : f32 to vector<16x16xf32>
    %140 = arith.mulf %139, %138 : vector<16x16xf32>
    %141 = arith.addf %117, %140 : vector<16x16xf32>
    %c42 = arith.constant 42 : index
    %142 = memref.load %arg2[%c42] : memref<98xf32, #tpu.memory_space<smem>>
    %c0_131 = arith.constant 0 : index
    %c6_132 = arith.constant 6 : index
    %c0_133 = arith.constant 0 : index
    %143 = vector.load %arg6[%c0_131, %c6_132, %c0_133] : memref<14x22x16xf32, #tpu.memory_space<vmem>>, vector<1x16x16xf32>
    %144 = vector.shape_cast %143 : vector<1x16x16xf32> to vector<16x16xf32>
    %145 = vector.broadcast %142 : f32 to vector<16x16xf32>
    %146 = arith.mulf %145, %144 : vector<16x16xf32>
    %147 = arith.addf %123, %146 : vector<16x16xf32>
    %c1_134 = arith.constant 1 : index
    %148 = memref.load %arg2[%c1_134] : memref<98xf32, #tpu.memory_space<smem>>
    %c1_135 = arith.constant 1 : index
    %c0_136 = arith.constant 0 : index
    %c0_137 = arith.constant 0 : index
    %149 = vector.load %arg6[%c1_135, %c0_136, %c0_137] : memref<14x22x16xf32, #tpu.memory_space<vmem>>, vector<1x16x16xf32>
    %150 = vector.shape_cast %149 : vector<1x16x16xf32> to vector<16x16xf32>
    %151 = vector.broadcast %148 : f32 to vector<16x16xf32>
    %152 = arith.mulf %151, %150 : vector<16x16xf32>
    %153 = arith.addf %129, %152 : vector<16x16xf32>
    %c8_138 = arith.constant 8 : index
    %154 = memref.load %arg2[%c8_138] : memref<98xf32, #tpu.memory_space<smem>>
    %c1_139 = arith.constant 1 : index
    %c1_140 = arith.constant 1 : index
    %c0_141 = arith.constant 0 : index
    %155 = vector.load %arg6[%c1_139, %c1_140, %c0_141] : memref<14x22x16xf32, #tpu.memory_space<vmem>>, vector<1x16x16xf32>
    %156 = vector.shape_cast %155 : vector<1x16x16xf32> to vector<16x16xf32>
    %157 = vector.broadcast %154 : f32 to vector<16x16xf32>
    %158 = arith.mulf %157, %156 : vector<16x16xf32>
    %159 = arith.addf %135, %158 : vector<16x16xf32>
    %c15 = arith.constant 15 : index
    %160 = memref.load %arg2[%c15] : memref<98xf32, #tpu.memory_space<smem>>
    %c1_142 = arith.constant 1 : index
    %c2_143 = arith.constant 2 : index
    %c0_144 = arith.constant 0 : index
    %161 = vector.load %arg6[%c1_142, %c2_143, %c0_144] : memref<14x22x16xf32, #tpu.memory_space<vmem>>, vector<1x16x16xf32>
    %162 = vector.shape_cast %161 : vector<1x16x16xf32> to vector<16x16xf32>
    %163 = vector.broadcast %160 : f32 to vector<16x16xf32>
    %164 = arith.mulf %163, %162 : vector<16x16xf32>
    %165 = arith.addf %141, %164 : vector<16x16xf32>
    %c22 = arith.constant 22 : index
    %166 = memref.load %arg2[%c22] : memref<98xf32, #tpu.memory_space<smem>>
    %c1_145 = arith.constant 1 : index
    %c3_146 = arith.constant 3 : index
    %c0_147 = arith.constant 0 : index
    %167 = vector.load %arg6[%c1_145, %c3_146, %c0_147] : memref<14x22x16xf32, #tpu.memory_space<vmem>>, vector<1x16x16xf32>
    %168 = vector.shape_cast %167 : vector<1x16x16xf32> to vector<16x16xf32>
    %169 = vector.broadcast %166 : f32 to vector<16x16xf32>
    %170 = arith.mulf %169, %168 : vector<16x16xf32>
    %171 = arith.addf %147, %170 : vector<16x16xf32>
    %c29 = arith.constant 29 : index
    %172 = memref.load %arg2[%c29] : memref<98xf32, #tpu.memory_space<smem>>
    %c1_148 = arith.constant 1 : index
    %c4_149 = arith.constant 4 : index
    %c0_150 = arith.constant 0 : index
    %173 = vector.load %arg6[%c1_148, %c4_149, %c0_150] : memref<14x22x16xf32, #tpu.memory_space<vmem>>, vector<1x16x16xf32>
    %174 = vector.shape_cast %173 : vector<1x16x16xf32> to vector<16x16xf32>
    %175 = vector.broadcast %172 : f32 to vector<16x16xf32>
    %176 = arith.mulf %175, %174 : vector<16x16xf32>
    %177 = arith.addf %153, %176 : vector<16x16xf32>
    %c36 = arith.constant 36 : index
    %178 = memref.load %arg2[%c36] : memref<98xf32, #tpu.memory_space<smem>>
    %c1_151 = arith.constant 1 : index
    %c5_152 = arith.constant 5 : index
    %c0_153 = arith.constant 0 : index
    %179 = vector.load %arg6[%c1_151, %c5_152, %c0_153] : memref<14x22x16xf32, #tpu.memory_space<vmem>>, vector<1x16x16xf32>
    %180 = vector.shape_cast %179 : vector<1x16x16xf32> to vector<16x16xf32>
    %181 = vector.broadcast %178 : f32 to vector<16x16xf32>
    %182 = arith.mulf %181, %180 : vector<16x16xf32>
    %183 = arith.addf %159, %182 : vector<16x16xf32>
    %c43 = arith.constant 43 : index
    %184 = memref.load %arg2[%c43] : memref<98xf32, #tpu.memory_space<smem>>
    %c1_154 = arith.constant 1 : index
    %c6_155 = arith.constant 6 : index
    %c0_156 = arith.constant 0 : index
    %185 = vector.load %arg6[%c1_154, %c6_155, %c0_156] : memref<14x22x16xf32, #tpu.memory_space<vmem>>, vector<1x16x16xf32>
    %186 = vector.shape_cast %185 : vector<1x16x16xf32> to vector<16x16xf32>
    %187 = vector.broadcast %184 : f32 to vector<16x16xf32>
    %188 = arith.mulf %187, %186 : vector<16x16xf32>
    %189 = arith.addf %165, %188 : vector<16x16xf32>
    %c2_157 = arith.constant 2 : index
    %190 = memref.load %arg2[%c2_157] : memref<98xf32, #tpu.memory_space<smem>>
    %c2_158 = arith.constant 2 : index
    %c0_159 = arith.constant 0 : index
    %c0_160 = arith.constant 0 : index
    %191 = vector.load %arg6[%c2_158, %c0_159, %c0_160] : memref<14x22x16xf32, #tpu.memory_space<vmem>>, vector<1x16x16xf32>
    %192 = vector.shape_cast %191 : vector<1x16x16xf32> to vector<16x16xf32>
    %193 = vector.broadcast %190 : f32 to vector<16x16xf32>
    %194 = arith.mulf %193, %192 : vector<16x16xf32>
    %195 = arith.addf %171, %194 : vector<16x16xf32>
    %c9_161 = arith.constant 9 : index
    %196 = memref.load %arg2[%c9_161] : memref<98xf32, #tpu.memory_space<smem>>
    %c2_162 = arith.constant 2 : index
    %c1_163 = arith.constant 1 : index
    %c0_164 = arith.constant 0 : index
    %197 = vector.load %arg6[%c2_162, %c1_163, %c0_164] : memref<14x22x16xf32, #tpu.memory_space<vmem>>, vector<1x16x16xf32>
    %198 = vector.shape_cast %197 : vector<1x16x16xf32> to vector<16x16xf32>
    %199 = vector.broadcast %196 : f32 to vector<16x16xf32>
    %200 = arith.mulf %199, %198 : vector<16x16xf32>
    %201 = arith.addf %177, %200 : vector<16x16xf32>
    %c16 = arith.constant 16 : index
    %202 = memref.load %arg2[%c16] : memref<98xf32, #tpu.memory_space<smem>>
    %c2_165 = arith.constant 2 : index
    %c2_166 = arith.constant 2 : index
    %c0_167 = arith.constant 0 : index
    %203 = vector.load %arg6[%c2_165, %c2_166, %c0_167] : memref<14x22x16xf32, #tpu.memory_space<vmem>>, vector<1x16x16xf32>
    %204 = vector.shape_cast %203 : vector<1x16x16xf32> to vector<16x16xf32>
    %205 = vector.broadcast %202 : f32 to vector<16x16xf32>
    %206 = arith.mulf %205, %204 : vector<16x16xf32>
    %207 = arith.addf %183, %206 : vector<16x16xf32>
    %c23 = arith.constant 23 : index
    %208 = memref.load %arg2[%c23] : memref<98xf32, #tpu.memory_space<smem>>
    %c2_168 = arith.constant 2 : index
    %c3_169 = arith.constant 3 : index
    %c0_170 = arith.constant 0 : index
    %209 = vector.load %arg6[%c2_168, %c3_169, %c0_170] : memref<14x22x16xf32, #tpu.memory_space<vmem>>, vector<1x16x16xf32>
    %210 = vector.shape_cast %209 : vector<1x16x16xf32> to vector<16x16xf32>
    %211 = vector.broadcast %208 : f32 to vector<16x16xf32>
    %212 = arith.mulf %211, %210 : vector<16x16xf32>
    %213 = arith.addf %189, %212 : vector<16x16xf32>
    %c30 = arith.constant 30 : index
    %214 = memref.load %arg2[%c30] : memref<98xf32, #tpu.memory_space<smem>>
    %c2_171 = arith.constant 2 : index
    %c4_172 = arith.constant 4 : index
    %c0_173 = arith.constant 0 : index
    %215 = vector.load %arg6[%c2_171, %c4_172, %c0_173] : memref<14x22x16xf32, #tpu.memory_space<vmem>>, vector<1x16x16xf32>
    %216 = vector.shape_cast %215 : vector<1x16x16xf32> to vector<16x16xf32>
    %217 = vector.broadcast %214 : f32 to vector<16x16xf32>
    %218 = arith.mulf %217, %216 : vector<16x16xf32>
    %219 = arith.addf %195, %218 : vector<16x16xf32>
    %c37 = arith.constant 37 : index
    %220 = memref.load %arg2[%c37] : memref<98xf32, #tpu.memory_space<smem>>
    %c2_174 = arith.constant 2 : index
    %c5_175 = arith.constant 5 : index
    %c0_176 = arith.constant 0 : index
    %221 = vector.load %arg6[%c2_174, %c5_175, %c0_176] : memref<14x22x16xf32, #tpu.memory_space<vmem>>, vector<1x16x16xf32>
    %222 = vector.shape_cast %221 : vector<1x16x16xf32> to vector<16x16xf32>
    %223 = vector.broadcast %220 : f32 to vector<16x16xf32>
    %224 = arith.mulf %223, %222 : vector<16x16xf32>
    %225 = arith.addf %201, %224 : vector<16x16xf32>
    %c44 = arith.constant 44 : index
    %226 = memref.load %arg2[%c44] : memref<98xf32, #tpu.memory_space<smem>>
    %c2_177 = arith.constant 2 : index
    %c6_178 = arith.constant 6 : index
    %c0_179 = arith.constant 0 : index
    %227 = vector.load %arg6[%c2_177, %c6_178, %c0_179] : memref<14x22x16xf32, #tpu.memory_space<vmem>>, vector<1x16x16xf32>
    %228 = vector.shape_cast %227 : vector<1x16x16xf32> to vector<16x16xf32>
    %229 = vector.broadcast %226 : f32 to vector<16x16xf32>
    %230 = arith.mulf %229, %228 : vector<16x16xf32>
    %231 = arith.addf %207, %230 : vector<16x16xf32>
    %c3_180 = arith.constant 3 : index
    %232 = memref.load %arg2[%c3_180] : memref<98xf32, #tpu.memory_space<smem>>
    %c3_181 = arith.constant 3 : index
    %c0_182 = arith.constant 0 : index
    %c0_183 = arith.constant 0 : index
    %233 = vector.load %arg6[%c3_181, %c0_182, %c0_183] : memref<14x22x16xf32, #tpu.memory_space<vmem>>, vector<1x16x16xf32>
    %234 = vector.shape_cast %233 : vector<1x16x16xf32> to vector<16x16xf32>
    %235 = vector.broadcast %232 : f32 to vector<16x16xf32>
    %236 = arith.mulf %235, %234 : vector<16x16xf32>
    %237 = arith.addf %213, %236 : vector<16x16xf32>
    %c10_184 = arith.constant 10 : index
    %238 = memref.load %arg2[%c10_184] : memref<98xf32, #tpu.memory_space<smem>>
    %c3_185 = arith.constant 3 : index
    %c1_186 = arith.constant 1 : index
    %c0_187 = arith.constant 0 : index
    %239 = vector.load %arg6[%c3_185, %c1_186, %c0_187] : memref<14x22x16xf32, #tpu.memory_space<vmem>>, vector<1x16x16xf32>
    %240 = vector.shape_cast %239 : vector<1x16x16xf32> to vector<16x16xf32>
    %241 = vector.broadcast %238 : f32 to vector<16x16xf32>
    %242 = arith.mulf %241, %240 : vector<16x16xf32>
    %243 = arith.addf %219, %242 : vector<16x16xf32>
    %c17 = arith.constant 17 : index
    %244 = memref.load %arg2[%c17] : memref<98xf32, #tpu.memory_space<smem>>
    %c3_188 = arith.constant 3 : index
    %c2_189 = arith.constant 2 : index
    %c0_190 = arith.constant 0 : index
    %245 = vector.load %arg6[%c3_188, %c2_189, %c0_190] : memref<14x22x16xf32, #tpu.memory_space<vmem>>, vector<1x16x16xf32>
    %246 = vector.shape_cast %245 : vector<1x16x16xf32> to vector<16x16xf32>
    %247 = vector.broadcast %244 : f32 to vector<16x16xf32>
    %248 = arith.mulf %247, %246 : vector<16x16xf32>
    %249 = arith.addf %225, %248 : vector<16x16xf32>
    %c24 = arith.constant 24 : index
    %250 = memref.load %arg2[%c24] : memref<98xf32, #tpu.memory_space<smem>>
    %c3_191 = arith.constant 3 : index
    %c3_192 = arith.constant 3 : index
    %c0_193 = arith.constant 0 : index
    %251 = vector.load %arg6[%c3_191, %c3_192, %c0_193] : memref<14x22x16xf32, #tpu.memory_space<vmem>>, vector<1x16x16xf32>
    %252 = vector.shape_cast %251 : vector<1x16x16xf32> to vector<16x16xf32>
    %253 = vector.broadcast %250 : f32 to vector<16x16xf32>
    %254 = arith.mulf %253, %252 : vector<16x16xf32>
    %255 = arith.addf %231, %254 : vector<16x16xf32>
    %c31 = arith.constant 31 : index
    %256 = memref.load %arg2[%c31] : memref<98xf32, #tpu.memory_space<smem>>
    %c3_194 = arith.constant 3 : index
    %c4_195 = arith.constant 4 : index
    %c0_196 = arith.constant 0 : index
    %257 = vector.load %arg6[%c3_194, %c4_195, %c0_196] : memref<14x22x16xf32, #tpu.memory_space<vmem>>, vector<1x16x16xf32>
    %258 = vector.shape_cast %257 : vector<1x16x16xf32> to vector<16x16xf32>
    %259 = vector.broadcast %256 : f32 to vector<16x16xf32>
    %260 = arith.mulf %259, %258 : vector<16x16xf32>
    %261 = arith.addf %237, %260 : vector<16x16xf32>
    %c38 = arith.constant 38 : index
    %262 = memref.load %arg2[%c38] : memref<98xf32, #tpu.memory_space<smem>>
    %c3_197 = arith.constant 3 : index
    %c5_198 = arith.constant 5 : index
    %c0_199 = arith.constant 0 : index
    %263 = vector.load %arg6[%c3_197, %c5_198, %c0_199] : memref<14x22x16xf32, #tpu.memory_space<vmem>>, vector<1x16x16xf32>
    %264 = vector.shape_cast %263 : vector<1x16x16xf32> to vector<16x16xf32>
    %265 = vector.broadcast %262 : f32 to vector<16x16xf32>
    %266 = arith.mulf %265, %264 : vector<16x16xf32>
    %267 = arith.addf %243, %266 : vector<16x16xf32>
    %c45 = arith.constant 45 : index
    %268 = memref.load %arg2[%c45] : memref<98xf32, #tpu.memory_space<smem>>
    %c3_200 = arith.constant 3 : index
    %c6_201 = arith.constant 6 : index
    %c0_202 = arith.constant 0 : index
    %269 = vector.load %arg6[%c3_200, %c6_201, %c0_202] : memref<14x22x16xf32, #tpu.memory_space<vmem>>, vector<1x16x16xf32>
    %270 = vector.shape_cast %269 : vector<1x16x16xf32> to vector<16x16xf32>
    %271 = vector.broadcast %268 : f32 to vector<16x16xf32>
    %272 = arith.mulf %271, %270 : vector<16x16xf32>
    %273 = arith.addf %249, %272 : vector<16x16xf32>
    %c4_203 = arith.constant 4 : index
    %274 = memref.load %arg2[%c4_203] : memref<98xf32, #tpu.memory_space<smem>>
    %c4_204 = arith.constant 4 : index
    %c0_205 = arith.constant 0 : index
    %c0_206 = arith.constant 0 : index
    %275 = vector.load %arg6[%c4_204, %c0_205, %c0_206] : memref<14x22x16xf32, #tpu.memory_space<vmem>>, vector<1x16x16xf32>
    %276 = vector.shape_cast %275 : vector<1x16x16xf32> to vector<16x16xf32>
    %277 = vector.broadcast %274 : f32 to vector<16x16xf32>
    %278 = arith.mulf %277, %276 : vector<16x16xf32>
    %279 = arith.addf %255, %278 : vector<16x16xf32>
    %c11_207 = arith.constant 11 : index
    %280 = memref.load %arg2[%c11_207] : memref<98xf32, #tpu.memory_space<smem>>
    %c4_208 = arith.constant 4 : index
    %c1_209 = arith.constant 1 : index
    %c0_210 = arith.constant 0 : index
    %281 = vector.load %arg6[%c4_208, %c1_209, %c0_210] : memref<14x22x16xf32, #tpu.memory_space<vmem>>, vector<1x16x16xf32>
    %282 = vector.shape_cast %281 : vector<1x16x16xf32> to vector<16x16xf32>
    %283 = vector.broadcast %280 : f32 to vector<16x16xf32>
    %284 = arith.mulf %283, %282 : vector<16x16xf32>
    %285 = arith.addf %261, %284 : vector<16x16xf32>
    %c18 = arith.constant 18 : index
    %286 = memref.load %arg2[%c18] : memref<98xf32, #tpu.memory_space<smem>>
    %c4_211 = arith.constant 4 : index
    %c2_212 = arith.constant 2 : index
    %c0_213 = arith.constant 0 : index
    %287 = vector.load %arg6[%c4_211, %c2_212, %c0_213] : memref<14x22x16xf32, #tpu.memory_space<vmem>>, vector<1x16x16xf32>
    %288 = vector.shape_cast %287 : vector<1x16x16xf32> to vector<16x16xf32>
    %289 = vector.broadcast %286 : f32 to vector<16x16xf32>
    %290 = arith.mulf %289, %288 : vector<16x16xf32>
    %291 = arith.addf %267, %290 : vector<16x16xf32>
    %c25 = arith.constant 25 : index
    %292 = memref.load %arg2[%c25] : memref<98xf32, #tpu.memory_space<smem>>
    %c4_214 = arith.constant 4 : index
    %c3_215 = arith.constant 3 : index
    %c0_216 = arith.constant 0 : index
    %293 = vector.load %arg6[%c4_214, %c3_215, %c0_216] : memref<14x22x16xf32, #tpu.memory_space<vmem>>, vector<1x16x16xf32>
    %294 = vector.shape_cast %293 : vector<1x16x16xf32> to vector<16x16xf32>
    %295 = vector.broadcast %292 : f32 to vector<16x16xf32>
    %296 = arith.mulf %295, %294 : vector<16x16xf32>
    %297 = arith.addf %273, %296 : vector<16x16xf32>
    %c32 = arith.constant 32 : index
    %298 = memref.load %arg2[%c32] : memref<98xf32, #tpu.memory_space<smem>>
    %c4_217 = arith.constant 4 : index
    %c4_218 = arith.constant 4 : index
    %c0_219 = arith.constant 0 : index
    %299 = vector.load %arg6[%c4_217, %c4_218, %c0_219] : memref<14x22x16xf32, #tpu.memory_space<vmem>>, vector<1x16x16xf32>
    %300 = vector.shape_cast %299 : vector<1x16x16xf32> to vector<16x16xf32>
    %301 = vector.broadcast %298 : f32 to vector<16x16xf32>
    %302 = arith.mulf %301, %300 : vector<16x16xf32>
    %303 = arith.addf %279, %302 : vector<16x16xf32>
    %c39 = arith.constant 39 : index
    %304 = memref.load %arg2[%c39] : memref<98xf32, #tpu.memory_space<smem>>
    %c4_220 = arith.constant 4 : index
    %c5_221 = arith.constant 5 : index
    %c0_222 = arith.constant 0 : index
    %305 = vector.load %arg6[%c4_220, %c5_221, %c0_222] : memref<14x22x16xf32, #tpu.memory_space<vmem>>, vector<1x16x16xf32>
    %306 = vector.shape_cast %305 : vector<1x16x16xf32> to vector<16x16xf32>
    %307 = vector.broadcast %304 : f32 to vector<16x16xf32>
    %308 = arith.mulf %307, %306 : vector<16x16xf32>
    %309 = arith.addf %285, %308 : vector<16x16xf32>
    %c46 = arith.constant 46 : index
    %310 = memref.load %arg2[%c46] : memref<98xf32, #tpu.memory_space<smem>>
    %c4_223 = arith.constant 4 : index
    %c6_224 = arith.constant 6 : index
    %c0_225 = arith.constant 0 : index
    %311 = vector.load %arg6[%c4_223, %c6_224, %c0_225] : memref<14x22x16xf32, #tpu.memory_space<vmem>>, vector<1x16x16xf32>
    %312 = vector.shape_cast %311 : vector<1x16x16xf32> to vector<16x16xf32>
    %313 = vector.broadcast %310 : f32 to vector<16x16xf32>
    %314 = arith.mulf %313, %312 : vector<16x16xf32>
    %315 = arith.addf %291, %314 : vector<16x16xf32>
    %c5_226 = arith.constant 5 : index
    %316 = memref.load %arg2[%c5_226] : memref<98xf32, #tpu.memory_space<smem>>
    %c5_227 = arith.constant 5 : index
    %c0_228 = arith.constant 0 : index
    %c0_229 = arith.constant 0 : index
    %317 = vector.load %arg6[%c5_227, %c0_228, %c0_229] : memref<14x22x16xf32, #tpu.memory_space<vmem>>, vector<1x16x16xf32>
    %318 = vector.shape_cast %317 : vector<1x16x16xf32> to vector<16x16xf32>
    %319 = vector.broadcast %316 : f32 to vector<16x16xf32>
    %320 = arith.mulf %319, %318 : vector<16x16xf32>
    %321 = arith.addf %297, %320 : vector<16x16xf32>
    %c12_230 = arith.constant 12 : index
    %322 = memref.load %arg2[%c12_230] : memref<98xf32, #tpu.memory_space<smem>>
    %c5_231 = arith.constant 5 : index
    %c1_232 = arith.constant 1 : index
    %c0_233 = arith.constant 0 : index
    %323 = vector.load %arg6[%c5_231, %c1_232, %c0_233] : memref<14x22x16xf32, #tpu.memory_space<vmem>>, vector<1x16x16xf32>
    %324 = vector.shape_cast %323 : vector<1x16x16xf32> to vector<16x16xf32>
    %325 = vector.broadcast %322 : f32 to vector<16x16xf32>
    %326 = arith.mulf %325, %324 : vector<16x16xf32>
    %327 = arith.addf %303, %326 : vector<16x16xf32>
    %c19_234 = arith.constant 19 : index
    %328 = memref.load %arg2[%c19_234] : memref<98xf32, #tpu.memory_space<smem>>
    %c5_235 = arith.constant 5 : index
    %c2_236 = arith.constant 2 : index
    %c0_237 = arith.constant 0 : index
    %329 = vector.load %arg6[%c5_235, %c2_236, %c0_237] : memref<14x22x16xf32, #tpu.memory_space<vmem>>, vector<1x16x16xf32>
    %330 = vector.shape_cast %329 : vector<1x16x16xf32> to vector<16x16xf32>
    %331 = vector.broadcast %328 : f32 to vector<16x16xf32>
    %332 = arith.mulf %331, %330 : vector<16x16xf32>
    %333 = arith.addf %309, %332 : vector<16x16xf32>
    %c26 = arith.constant 26 : index
    %334 = memref.load %arg2[%c26] : memref<98xf32, #tpu.memory_space<smem>>
    %c5_238 = arith.constant 5 : index
    %c3_239 = arith.constant 3 : index
    %c0_240 = arith.constant 0 : index
    %335 = vector.load %arg6[%c5_238, %c3_239, %c0_240] : memref<14x22x16xf32, #tpu.memory_space<vmem>>, vector<1x16x16xf32>
    %336 = vector.shape_cast %335 : vector<1x16x16xf32> to vector<16x16xf32>
    %337 = vector.broadcast %334 : f32 to vector<16x16xf32>
    %338 = arith.mulf %337, %336 : vector<16x16xf32>
    %339 = arith.addf %315, %338 : vector<16x16xf32>
    %c33 = arith.constant 33 : index
    %340 = memref.load %arg2[%c33] : memref<98xf32, #tpu.memory_space<smem>>
    %c5_241 = arith.constant 5 : index
    %c4_242 = arith.constant 4 : index
    %c0_243 = arith.constant 0 : index
    %341 = vector.load %arg6[%c5_241, %c4_242, %c0_243] : memref<14x22x16xf32, #tpu.memory_space<vmem>>, vector<1x16x16xf32>
    %342 = vector.shape_cast %341 : vector<1x16x16xf32> to vector<16x16xf32>
    %343 = vector.broadcast %340 : f32 to vector<16x16xf32>
    %344 = arith.mulf %343, %342 : vector<16x16xf32>
    %345 = arith.addf %321, %344 : vector<16x16xf32>
    %c40 = arith.constant 40 : index
    %346 = memref.load %arg2[%c40] : memref<98xf32, #tpu.memory_space<smem>>
    %c5_244 = arith.constant 5 : index
    %c5_245 = arith.constant 5 : index
    %c0_246 = arith.constant 0 : index
    %347 = vector.load %arg6[%c5_244, %c5_245, %c0_246] : memref<14x22x16xf32, #tpu.memory_space<vmem>>, vector<1x16x16xf32>
    %348 = vector.shape_cast %347 : vector<1x16x16xf32> to vector<16x16xf32>
    %349 = vector.broadcast %346 : f32 to vector<16x16xf32>
    %350 = arith.mulf %349, %348 : vector<16x16xf32>
    %351 = arith.addf %327, %350 : vector<16x16xf32>
    %c47 = arith.constant 47 : index
    %352 = memref.load %arg2[%c47] : memref<98xf32, #tpu.memory_space<smem>>
    %c5_247 = arith.constant 5 : index
    %c6_248 = arith.constant 6 : index
    %c0_249 = arith.constant 0 : index
    %353 = vector.load %arg6[%c5_247, %c6_248, %c0_249] : memref<14x22x16xf32, #tpu.memory_space<vmem>>, vector<1x16x16xf32>
    %354 = vector.shape_cast %353 : vector<1x16x16xf32> to vector<16x16xf32>
    %355 = vector.broadcast %352 : f32 to vector<16x16xf32>
    %356 = arith.mulf %355, %354 : vector<16x16xf32>
    %357 = arith.addf %333, %356 : vector<16x16xf32>
    %c6_250 = arith.constant 6 : index
    %358 = memref.load %arg2[%c6_250] : memref<98xf32, #tpu.memory_space<smem>>
    %c6_251 = arith.constant 6 : index
    %c0_252 = arith.constant 0 : index
    %c0_253 = arith.constant 0 : index
    %359 = vector.load %arg6[%c6_251, %c0_252, %c0_253] : memref<14x22x16xf32, #tpu.memory_space<vmem>>, vector<1x16x16xf32>
    %360 = vector.shape_cast %359 : vector<1x16x16xf32> to vector<16x16xf32>
    %361 = vector.broadcast %358 : f32 to vector<16x16xf32>
    %362 = arith.mulf %361, %360 : vector<16x16xf32>
    %363 = arith.addf %339, %362 : vector<16x16xf32>
    %c13_254 = arith.constant 13 : index
    %364 = memref.load %arg2[%c13_254] : memref<98xf32, #tpu.memory_space<smem>>
    %c6_255 = arith.constant 6 : index
    %c1_256 = arith.constant 1 : index
    %c0_257 = arith.constant 0 : index
    %365 = vector.load %arg6[%c6_255, %c1_256, %c0_257] : memref<14x22x16xf32, #tpu.memory_space<vmem>>, vector<1x16x16xf32>
    %366 = vector.shape_cast %365 : vector<1x16x16xf32> to vector<16x16xf32>
    %367 = vector.broadcast %364 : f32 to vector<16x16xf32>
    %368 = arith.mulf %367, %366 : vector<16x16xf32>
    %369 = arith.addf %345, %368 : vector<16x16xf32>
    %c20 = arith.constant 20 : index
    %370 = memref.load %arg2[%c20] : memref<98xf32, #tpu.memory_space<smem>>
    %c6_258 = arith.constant 6 : index
    %c2_259 = arith.constant 2 : index
    %c0_260 = arith.constant 0 : index
    %371 = vector.load %arg6[%c6_258, %c2_259, %c0_260] : memref<14x22x16xf32, #tpu.memory_space<vmem>>, vector<1x16x16xf32>
    %372 = vector.shape_cast %371 : vector<1x16x16xf32> to vector<16x16xf32>
    %373 = vector.broadcast %370 : f32 to vector<16x16xf32>
    %374 = arith.mulf %373, %372 : vector<16x16xf32>
    %375 = arith.addf %351, %374 : vector<16x16xf32>
    %c27 = arith.constant 27 : index
    %376 = memref.load %arg2[%c27] : memref<98xf32, #tpu.memory_space<smem>>
    %c6_261 = arith.constant 6 : index
    %c3_262 = arith.constant 3 : index
    %c0_263 = arith.constant 0 : index
    %377 = vector.load %arg6[%c6_261, %c3_262, %c0_263] : memref<14x22x16xf32, #tpu.memory_space<vmem>>, vector<1x16x16xf32>
    %378 = vector.shape_cast %377 : vector<1x16x16xf32> to vector<16x16xf32>
    %379 = vector.broadcast %376 : f32 to vector<16x16xf32>
    %380 = arith.mulf %379, %378 : vector<16x16xf32>
    %381 = arith.addf %357, %380 : vector<16x16xf32>
    %c34 = arith.constant 34 : index
    %382 = memref.load %arg2[%c34] : memref<98xf32, #tpu.memory_space<smem>>
    %c6_264 = arith.constant 6 : index
    %c4_265 = arith.constant 4 : index
    %c0_266 = arith.constant 0 : index
    %383 = vector.load %arg6[%c6_264, %c4_265, %c0_266] : memref<14x22x16xf32, #tpu.memory_space<vmem>>, vector<1x16x16xf32>
    %384 = vector.shape_cast %383 : vector<1x16x16xf32> to vector<16x16xf32>
    %385 = vector.broadcast %382 : f32 to vector<16x16xf32>
    %386 = arith.mulf %385, %384 : vector<16x16xf32>
    %387 = arith.addf %363, %386 : vector<16x16xf32>
    %c41 = arith.constant 41 : index
    %388 = memref.load %arg2[%c41] : memref<98xf32, #tpu.memory_space<smem>>
    %c6_267 = arith.constant 6 : index
    %c5_268 = arith.constant 5 : index
    %c0_269 = arith.constant 0 : index
    %389 = vector.load %arg6[%c6_267, %c5_268, %c0_269] : memref<14x22x16xf32, #tpu.memory_space<vmem>>, vector<1x16x16xf32>
    %390 = vector.shape_cast %389 : vector<1x16x16xf32> to vector<16x16xf32>
    %391 = vector.broadcast %388 : f32 to vector<16x16xf32>
    %392 = arith.mulf %391, %390 : vector<16x16xf32>
    %393 = arith.addf %369, %392 : vector<16x16xf32>
    %c48 = arith.constant 48 : index
    %394 = memref.load %arg2[%c48] : memref<98xf32, #tpu.memory_space<smem>>
    %c6_270 = arith.constant 6 : index
    %c6_271 = arith.constant 6 : index
    %c0_272 = arith.constant 0 : index
    %395 = vector.load %arg6[%c6_270, %c6_271, %c0_272] : memref<14x22x16xf32, #tpu.memory_space<vmem>>, vector<1x16x16xf32>
    %396 = vector.shape_cast %395 : vector<1x16x16xf32> to vector<16x16xf32>
    %397 = vector.broadcast %394 : f32 to vector<16x16xf32>
    %398 = arith.mulf %397, %396 : vector<16x16xf32>
    %399 = arith.addf %375, %398 : vector<16x16xf32>
    %c49 = arith.constant 49 : index
    %400 = memref.load %arg2[%c49] : memref<98xf32, #tpu.memory_space<smem>>
    %c7_273 = arith.constant 7 : index
    %c0_274 = arith.constant 0 : index
    %c0_275 = arith.constant 0 : index
    %401 = vector.load %arg6[%c7_273, %c0_274, %c0_275] : memref<14x22x16xf32, #tpu.memory_space<vmem>>, vector<1x16x16xf32>
    %402 = vector.shape_cast %401 : vector<1x16x16xf32> to vector<16x16xf32>
    %403 = vector.broadcast %400 : f32 to vector<16x16xf32>
    %404 = arith.mulf %403, %402 : vector<16x16xf32>
    %405 = arith.addf %381, %404 : vector<16x16xf32>
    %c56 = arith.constant 56 : index
    %406 = memref.load %arg2[%c56] : memref<98xf32, #tpu.memory_space<smem>>
    %c7_276 = arith.constant 7 : index
    %c1_277 = arith.constant 1 : index
    %c0_278 = arith.constant 0 : index
    %407 = vector.load %arg6[%c7_276, %c1_277, %c0_278] : memref<14x22x16xf32, #tpu.memory_space<vmem>>, vector<1x16x16xf32>
    %408 = vector.shape_cast %407 : vector<1x16x16xf32> to vector<16x16xf32>
    %409 = vector.broadcast %406 : f32 to vector<16x16xf32>
    %410 = arith.mulf %409, %408 : vector<16x16xf32>
    %411 = arith.addf %387, %410 : vector<16x16xf32>
    %c63 = arith.constant 63 : index
    %412 = memref.load %arg2[%c63] : memref<98xf32, #tpu.memory_space<smem>>
    %c7_279 = arith.constant 7 : index
    %c2_280 = arith.constant 2 : index
    %c0_281 = arith.constant 0 : index
    %413 = vector.load %arg6[%c7_279, %c2_280, %c0_281] : memref<14x22x16xf32, #tpu.memory_space<vmem>>, vector<1x16x16xf32>
    %414 = vector.shape_cast %413 : vector<1x16x16xf32> to vector<16x16xf32>
    %415 = vector.broadcast %412 : f32 to vector<16x16xf32>
    %416 = arith.mulf %415, %414 : vector<16x16xf32>
    %417 = arith.addf %393, %416 : vector<16x16xf32>
    %c70 = arith.constant 70 : index
    %418 = memref.load %arg2[%c70] : memref<98xf32, #tpu.memory_space<smem>>
    %c7_282 = arith.constant 7 : index
    %c3_283 = arith.constant 3 : index
    %c0_284 = arith.constant 0 : index
    %419 = vector.load %arg6[%c7_282, %c3_283, %c0_284] : memref<14x22x16xf32, #tpu.memory_space<vmem>>, vector<1x16x16xf32>
    %420 = vector.shape_cast %419 : vector<1x16x16xf32> to vector<16x16xf32>
    %421 = vector.broadcast %418 : f32 to vector<16x16xf32>
    %422 = arith.mulf %421, %420 : vector<16x16xf32>
    %423 = arith.addf %399, %422 : vector<16x16xf32>
    %c77 = arith.constant 77 : index
    %424 = memref.load %arg2[%c77] : memref<98xf32, #tpu.memory_space<smem>>
    %c7_285 = arith.constant 7 : index
    %c4_286 = arith.constant 4 : index
    %c0_287 = arith.constant 0 : index
    %425 = vector.load %arg6[%c7_285, %c4_286, %c0_287] : memref<14x22x16xf32, #tpu.memory_space<vmem>>, vector<1x16x16xf32>
    %426 = vector.shape_cast %425 : vector<1x16x16xf32> to vector<16x16xf32>
    %427 = vector.broadcast %424 : f32 to vector<16x16xf32>
    %428 = arith.mulf %427, %426 : vector<16x16xf32>
    %429 = arith.addf %405, %428 : vector<16x16xf32>
    %c84 = arith.constant 84 : index
    %430 = memref.load %arg2[%c84] : memref<98xf32, #tpu.memory_space<smem>>
    %c7_288 = arith.constant 7 : index
    %c5_289 = arith.constant 5 : index
    %c0_290 = arith.constant 0 : index
    %431 = vector.load %arg6[%c7_288, %c5_289, %c0_290] : memref<14x22x16xf32, #tpu.memory_space<vmem>>, vector<1x16x16xf32>
    %432 = vector.shape_cast %431 : vector<1x16x16xf32> to vector<16x16xf32>
    %433 = vector.broadcast %430 : f32 to vector<16x16xf32>
    %434 = arith.mulf %433, %432 : vector<16x16xf32>
    %435 = arith.addf %411, %434 : vector<16x16xf32>
    %c91 = arith.constant 91 : index
    %436 = memref.load %arg2[%c91] : memref<98xf32, #tpu.memory_space<smem>>
    %c7_291 = arith.constant 7 : index
    %c6_292 = arith.constant 6 : index
    %c0_293 = arith.constant 0 : index
    %437 = vector.load %arg6[%c7_291, %c6_292, %c0_293] : memref<14x22x16xf32, #tpu.memory_space<vmem>>, vector<1x16x16xf32>
    %438 = vector.shape_cast %437 : vector<1x16x16xf32> to vector<16x16xf32>
    %439 = vector.broadcast %436 : f32 to vector<16x16xf32>
    %440 = arith.mulf %439, %438 : vector<16x16xf32>
    %441 = arith.addf %417, %440 : vector<16x16xf32>
    %c50 = arith.constant 50 : index
    %442 = memref.load %arg2[%c50] : memref<98xf32, #tpu.memory_space<smem>>
    %c8_294 = arith.constant 8 : index
    %c0_295 = arith.constant 0 : index
    %c0_296 = arith.constant 0 : index
    %443 = vector.load %arg6[%c8_294, %c0_295, %c0_296] : memref<14x22x16xf32, #tpu.memory_space<vmem>>, vector<1x16x16xf32>
    %444 = vector.shape_cast %443 : vector<1x16x16xf32> to vector<16x16xf32>
    %445 = vector.broadcast %442 : f32 to vector<16x16xf32>
    %446 = arith.mulf %445, %444 : vector<16x16xf32>
    %447 = arith.addf %423, %446 : vector<16x16xf32>
    %c57 = arith.constant 57 : index
    %448 = memref.load %arg2[%c57] : memref<98xf32, #tpu.memory_space<smem>>
    %c8_297 = arith.constant 8 : index
    %c1_298 = arith.constant 1 : index
    %c0_299 = arith.constant 0 : index
    %449 = vector.load %arg6[%c8_297, %c1_298, %c0_299] : memref<14x22x16xf32, #tpu.memory_space<vmem>>, vector<1x16x16xf32>
    %450 = vector.shape_cast %449 : vector<1x16x16xf32> to vector<16x16xf32>
    %451 = vector.broadcast %448 : f32 to vector<16x16xf32>
    %452 = arith.mulf %451, %450 : vector<16x16xf32>
    %453 = arith.addf %429, %452 : vector<16x16xf32>
    %c64 = arith.constant 64 : index
    %454 = memref.load %arg2[%c64] : memref<98xf32, #tpu.memory_space<smem>>
    %c8_300 = arith.constant 8 : index
    %c2_301 = arith.constant 2 : index
    %c0_302 = arith.constant 0 : index
    %455 = vector.load %arg6[%c8_300, %c2_301, %c0_302] : memref<14x22x16xf32, #tpu.memory_space<vmem>>, vector<1x16x16xf32>
    %456 = vector.shape_cast %455 : vector<1x16x16xf32> to vector<16x16xf32>
    %457 = vector.broadcast %454 : f32 to vector<16x16xf32>
    %458 = arith.mulf %457, %456 : vector<16x16xf32>
    %459 = arith.addf %435, %458 : vector<16x16xf32>
    %c71 = arith.constant 71 : index
    %460 = memref.load %arg2[%c71] : memref<98xf32, #tpu.memory_space<smem>>
    %c8_303 = arith.constant 8 : index
    %c3_304 = arith.constant 3 : index
    %c0_305 = arith.constant 0 : index
    %461 = vector.load %arg6[%c8_303, %c3_304, %c0_305] : memref<14x22x16xf32, #tpu.memory_space<vmem>>, vector<1x16x16xf32>
    %462 = vector.shape_cast %461 : vector<1x16x16xf32> to vector<16x16xf32>
    %463 = vector.broadcast %460 : f32 to vector<16x16xf32>
    %464 = arith.mulf %463, %462 : vector<16x16xf32>
    %465 = arith.addf %441, %464 : vector<16x16xf32>
    %c78 = arith.constant 78 : index
    %466 = memref.load %arg2[%c78] : memref<98xf32, #tpu.memory_space<smem>>
    %c8_306 = arith.constant 8 : index
    %c4_307 = arith.constant 4 : index
    %c0_308 = arith.constant 0 : index
    %467 = vector.load %arg6[%c8_306, %c4_307, %c0_308] : memref<14x22x16xf32, #tpu.memory_space<vmem>>, vector<1x16x16xf32>
    %468 = vector.shape_cast %467 : vector<1x16x16xf32> to vector<16x16xf32>
    %469 = vector.broadcast %466 : f32 to vector<16x16xf32>
    %470 = arith.mulf %469, %468 : vector<16x16xf32>
    %471 = arith.addf %447, %470 : vector<16x16xf32>
    %c85 = arith.constant 85 : index
    %472 = memref.load %arg2[%c85] : memref<98xf32, #tpu.memory_space<smem>>
    %c8_309 = arith.constant 8 : index
    %c5_310 = arith.constant 5 : index
    %c0_311 = arith.constant 0 : index
    %473 = vector.load %arg6[%c8_309, %c5_310, %c0_311] : memref<14x22x16xf32, #tpu.memory_space<vmem>>, vector<1x16x16xf32>
    %474 = vector.shape_cast %473 : vector<1x16x16xf32> to vector<16x16xf32>
    %475 = vector.broadcast %472 : f32 to vector<16x16xf32>
    %476 = arith.mulf %475, %474 : vector<16x16xf32>
    %477 = arith.addf %453, %476 : vector<16x16xf32>
    %c92 = arith.constant 92 : index
    %478 = memref.load %arg2[%c92] : memref<98xf32, #tpu.memory_space<smem>>
    %c8_312 = arith.constant 8 : index
    %c6_313 = arith.constant 6 : index
    %c0_314 = arith.constant 0 : index
    %479 = vector.load %arg6[%c8_312, %c6_313, %c0_314] : memref<14x22x16xf32, #tpu.memory_space<vmem>>, vector<1x16x16xf32>
    %480 = vector.shape_cast %479 : vector<1x16x16xf32> to vector<16x16xf32>
    %481 = vector.broadcast %478 : f32 to vector<16x16xf32>
    %482 = arith.mulf %481, %480 : vector<16x16xf32>
    %483 = arith.addf %459, %482 : vector<16x16xf32>
    %c51 = arith.constant 51 : index
    %484 = memref.load %arg2[%c51] : memref<98xf32, #tpu.memory_space<smem>>
    %c9_315 = arith.constant 9 : index
    %c0_316 = arith.constant 0 : index
    %c0_317 = arith.constant 0 : index
    %485 = vector.load %arg6[%c9_315, %c0_316, %c0_317] : memref<14x22x16xf32, #tpu.memory_space<vmem>>, vector<1x16x16xf32>
    %486 = vector.shape_cast %485 : vector<1x16x16xf32> to vector<16x16xf32>
    %487 = vector.broadcast %484 : f32 to vector<16x16xf32>
    %488 = arith.mulf %487, %486 : vector<16x16xf32>
    %489 = arith.addf %465, %488 : vector<16x16xf32>
    %c58 = arith.constant 58 : index
    %490 = memref.load %arg2[%c58] : memref<98xf32, #tpu.memory_space<smem>>
    %c9_318 = arith.constant 9 : index
    %c1_319 = arith.constant 1 : index
    %c0_320 = arith.constant 0 : index
    %491 = vector.load %arg6[%c9_318, %c1_319, %c0_320] : memref<14x22x16xf32, #tpu.memory_space<vmem>>, vector<1x16x16xf32>
    %492 = vector.shape_cast %491 : vector<1x16x16xf32> to vector<16x16xf32>
    %493 = vector.broadcast %490 : f32 to vector<16x16xf32>
    %494 = arith.mulf %493, %492 : vector<16x16xf32>
    %495 = arith.addf %471, %494 : vector<16x16xf32>
    %c65 = arith.constant 65 : index
    %496 = memref.load %arg2[%c65] : memref<98xf32, #tpu.memory_space<smem>>
    %c9_321 = arith.constant 9 : index
    %c2_322 = arith.constant 2 : index
    %c0_323 = arith.constant 0 : index
    %497 = vector.load %arg6[%c9_321, %c2_322, %c0_323] : memref<14x22x16xf32, #tpu.memory_space<vmem>>, vector<1x16x16xf32>
    %498 = vector.shape_cast %497 : vector<1x16x16xf32> to vector<16x16xf32>
    %499 = vector.broadcast %496 : f32 to vector<16x16xf32>
    %500 = arith.mulf %499, %498 : vector<16x16xf32>
    %501 = arith.addf %477, %500 : vector<16x16xf32>
    %c72 = arith.constant 72 : index
    %502 = memref.load %arg2[%c72] : memref<98xf32, #tpu.memory_space<smem>>
    %c9_324 = arith.constant 9 : index
    %c3_325 = arith.constant 3 : index
    %c0_326 = arith.constant 0 : index
    %503 = vector.load %arg6[%c9_324, %c3_325, %c0_326] : memref<14x22x16xf32, #tpu.memory_space<vmem>>, vector<1x16x16xf32>
    %504 = vector.shape_cast %503 : vector<1x16x16xf32> to vector<16x16xf32>
    %505 = vector.broadcast %502 : f32 to vector<16x16xf32>
    %506 = arith.mulf %505, %504 : vector<16x16xf32>
    %507 = arith.addf %483, %506 : vector<16x16xf32>
    %c79 = arith.constant 79 : index
    %508 = memref.load %arg2[%c79] : memref<98xf32, #tpu.memory_space<smem>>
    %c9_327 = arith.constant 9 : index
    %c4_328 = arith.constant 4 : index
    %c0_329 = arith.constant 0 : index
    %509 = vector.load %arg6[%c9_327, %c4_328, %c0_329] : memref<14x22x16xf32, #tpu.memory_space<vmem>>, vector<1x16x16xf32>
    %510 = vector.shape_cast %509 : vector<1x16x16xf32> to vector<16x16xf32>
    %511 = vector.broadcast %508 : f32 to vector<16x16xf32>
    %512 = arith.mulf %511, %510 : vector<16x16xf32>
    %513 = arith.addf %489, %512 : vector<16x16xf32>
    %c86 = arith.constant 86 : index
    %514 = memref.load %arg2[%c86] : memref<98xf32, #tpu.memory_space<smem>>
    %c9_330 = arith.constant 9 : index
    %c5_331 = arith.constant 5 : index
    %c0_332 = arith.constant 0 : index
    %515 = vector.load %arg6[%c9_330, %c5_331, %c0_332] : memref<14x22x16xf32, #tpu.memory_space<vmem>>, vector<1x16x16xf32>
    %516 = vector.shape_cast %515 : vector<1x16x16xf32> to vector<16x16xf32>
    %517 = vector.broadcast %514 : f32 to vector<16x16xf32>
    %518 = arith.mulf %517, %516 : vector<16x16xf32>
    %519 = arith.addf %495, %518 : vector<16x16xf32>
    %c93 = arith.constant 93 : index
    %520 = memref.load %arg2[%c93] : memref<98xf32, #tpu.memory_space<smem>>
    %c9_333 = arith.constant 9 : index
    %c6_334 = arith.constant 6 : index
    %c0_335 = arith.constant 0 : index
    %521 = vector.load %arg6[%c9_333, %c6_334, %c0_335] : memref<14x22x16xf32, #tpu.memory_space<vmem>>, vector<1x16x16xf32>
    %522 = vector.shape_cast %521 : vector<1x16x16xf32> to vector<16x16xf32>
    %523 = vector.broadcast %520 : f32 to vector<16x16xf32>
    %524 = arith.mulf %523, %522 : vector<16x16xf32>
    %525 = arith.addf %501, %524 : vector<16x16xf32>
    %c52 = arith.constant 52 : index
    %526 = memref.load %arg2[%c52] : memref<98xf32, #tpu.memory_space<smem>>
    %c10_336 = arith.constant 10 : index
    %c0_337 = arith.constant 0 : index
    %c0_338 = arith.constant 0 : index
    %527 = vector.load %arg6[%c10_336, %c0_337, %c0_338] : memref<14x22x16xf32, #tpu.memory_space<vmem>>, vector<1x16x16xf32>
    %528 = vector.shape_cast %527 : vector<1x16x16xf32> to vector<16x16xf32>
    %529 = vector.broadcast %526 : f32 to vector<16x16xf32>
    %530 = arith.mulf %529, %528 : vector<16x16xf32>
    %531 = arith.addf %507, %530 : vector<16x16xf32>
    %c59 = arith.constant 59 : index
    %532 = memref.load %arg2[%c59] : memref<98xf32, #tpu.memory_space<smem>>
    %c10_339 = arith.constant 10 : index
    %c1_340 = arith.constant 1 : index
    %c0_341 = arith.constant 0 : index
    %533 = vector.load %arg6[%c10_339, %c1_340, %c0_341] : memref<14x22x16xf32, #tpu.memory_space<vmem>>, vector<1x16x16xf32>
    %534 = vector.shape_cast %533 : vector<1x16x16xf32> to vector<16x16xf32>
    %535 = vector.broadcast %532 : f32 to vector<16x16xf32>
    %536 = arith.mulf %535, %534 : vector<16x16xf32>
    %537 = arith.addf %513, %536 : vector<16x16xf32>
    %c66 = arith.constant 66 : index
    %538 = memref.load %arg2[%c66] : memref<98xf32, #tpu.memory_space<smem>>
    %c10_342 = arith.constant 10 : index
    %c2_343 = arith.constant 2 : index
    %c0_344 = arith.constant 0 : index
    %539 = vector.load %arg6[%c10_342, %c2_343, %c0_344] : memref<14x22x16xf32, #tpu.memory_space<vmem>>, vector<1x16x16xf32>
    %540 = vector.shape_cast %539 : vector<1x16x16xf32> to vector<16x16xf32>
    %541 = vector.broadcast %538 : f32 to vector<16x16xf32>
    %542 = arith.mulf %541, %540 : vector<16x16xf32>
    %543 = arith.addf %519, %542 : vector<16x16xf32>
    %c73 = arith.constant 73 : index
    %544 = memref.load %arg2[%c73] : memref<98xf32, #tpu.memory_space<smem>>
    %c10_345 = arith.constant 10 : index
    %c3_346 = arith.constant 3 : index
    %c0_347 = arith.constant 0 : index
    %545 = vector.load %arg6[%c10_345, %c3_346, %c0_347] : memref<14x22x16xf32, #tpu.memory_space<vmem>>, vector<1x16x16xf32>
    %546 = vector.shape_cast %545 : vector<1x16x16xf32> to vector<16x16xf32>
    %547 = vector.broadcast %544 : f32 to vector<16x16xf32>
    %548 = arith.mulf %547, %546 : vector<16x16xf32>
    %549 = arith.addf %525, %548 : vector<16x16xf32>
    %c80 = arith.constant 80 : index
    %550 = memref.load %arg2[%c80] : memref<98xf32, #tpu.memory_space<smem>>
    %c10_348 = arith.constant 10 : index
    %c4_349 = arith.constant 4 : index
    %c0_350 = arith.constant 0 : index
    %551 = vector.load %arg6[%c10_348, %c4_349, %c0_350] : memref<14x22x16xf32, #tpu.memory_space<vmem>>, vector<1x16x16xf32>
    %552 = vector.shape_cast %551 : vector<1x16x16xf32> to vector<16x16xf32>
    %553 = vector.broadcast %550 : f32 to vector<16x16xf32>
    %554 = arith.mulf %553, %552 : vector<16x16xf32>
    %555 = arith.addf %531, %554 : vector<16x16xf32>
    %c87 = arith.constant 87 : index
    %556 = memref.load %arg2[%c87] : memref<98xf32, #tpu.memory_space<smem>>
    %c10_351 = arith.constant 10 : index
    %c5_352 = arith.constant 5 : index
    %c0_353 = arith.constant 0 : index
    %557 = vector.load %arg6[%c10_351, %c5_352, %c0_353] : memref<14x22x16xf32, #tpu.memory_space<vmem>>, vector<1x16x16xf32>
    %558 = vector.shape_cast %557 : vector<1x16x16xf32> to vector<16x16xf32>
    %559 = vector.broadcast %556 : f32 to vector<16x16xf32>
    %560 = arith.mulf %559, %558 : vector<16x16xf32>
    %561 = arith.addf %537, %560 : vector<16x16xf32>
    %c94 = arith.constant 94 : index
    %562 = memref.load %arg2[%c94] : memref<98xf32, #tpu.memory_space<smem>>
    %c10_354 = arith.constant 10 : index
    %c6_355 = arith.constant 6 : index
    %c0_356 = arith.constant 0 : index
    %563 = vector.load %arg6[%c10_354, %c6_355, %c0_356] : memref<14x22x16xf32, #tpu.memory_space<vmem>>, vector<1x16x16xf32>
    %564 = vector.shape_cast %563 : vector<1x16x16xf32> to vector<16x16xf32>
    %565 = vector.broadcast %562 : f32 to vector<16x16xf32>
    %566 = arith.mulf %565, %564 : vector<16x16xf32>
    %567 = arith.addf %543, %566 : vector<16x16xf32>
    %c53 = arith.constant 53 : index
    %568 = memref.load %arg2[%c53] : memref<98xf32, #tpu.memory_space<smem>>
    %c11_357 = arith.constant 11 : index
    %c0_358 = arith.constant 0 : index
    %c0_359 = arith.constant 0 : index
    %569 = vector.load %arg6[%c11_357, %c0_358, %c0_359] : memref<14x22x16xf32, #tpu.memory_space<vmem>>, vector<1x16x16xf32>
    %570 = vector.shape_cast %569 : vector<1x16x16xf32> to vector<16x16xf32>
    %571 = vector.broadcast %568 : f32 to vector<16x16xf32>
    %572 = arith.mulf %571, %570 : vector<16x16xf32>
    %573 = arith.addf %549, %572 : vector<16x16xf32>
    %c60 = arith.constant 60 : index
    %574 = memref.load %arg2[%c60] : memref<98xf32, #tpu.memory_space<smem>>
    %c11_360 = arith.constant 11 : index
    %c1_361 = arith.constant 1 : index
    %c0_362 = arith.constant 0 : index
    %575 = vector.load %arg6[%c11_360, %c1_361, %c0_362] : memref<14x22x16xf32, #tpu.memory_space<vmem>>, vector<1x16x16xf32>
    %576 = vector.shape_cast %575 : vector<1x16x16xf32> to vector<16x16xf32>
    %577 = vector.broadcast %574 : f32 to vector<16x16xf32>
    %578 = arith.mulf %577, %576 : vector<16x16xf32>
    %579 = arith.addf %555, %578 : vector<16x16xf32>
    %c67 = arith.constant 67 : index
    %580 = memref.load %arg2[%c67] : memref<98xf32, #tpu.memory_space<smem>>
    %c11_363 = arith.constant 11 : index
    %c2_364 = arith.constant 2 : index
    %c0_365 = arith.constant 0 : index
    %581 = vector.load %arg6[%c11_363, %c2_364, %c0_365] : memref<14x22x16xf32, #tpu.memory_space<vmem>>, vector<1x16x16xf32>
    %582 = vector.shape_cast %581 : vector<1x16x16xf32> to vector<16x16xf32>
    %583 = vector.broadcast %580 : f32 to vector<16x16xf32>
    %584 = arith.mulf %583, %582 : vector<16x16xf32>
    %585 = arith.addf %561, %584 : vector<16x16xf32>
    %c74 = arith.constant 74 : index
    %586 = memref.load %arg2[%c74] : memref<98xf32, #tpu.memory_space<smem>>
    %c11_366 = arith.constant 11 : index
    %c3_367 = arith.constant 3 : index
    %c0_368 = arith.constant 0 : index
    %587 = vector.load %arg6[%c11_366, %c3_367, %c0_368] : memref<14x22x16xf32, #tpu.memory_space<vmem>>, vector<1x16x16xf32>
    %588 = vector.shape_cast %587 : vector<1x16x16xf32> to vector<16x16xf32>
    %589 = vector.broadcast %586 : f32 to vector<16x16xf32>
    %590 = arith.mulf %589, %588 : vector<16x16xf32>
    %591 = arith.addf %567, %590 : vector<16x16xf32>
    %c81 = arith.constant 81 : index
    %592 = memref.load %arg2[%c81] : memref<98xf32, #tpu.memory_space<smem>>
    %c11_369 = arith.constant 11 : index
    %c4_370 = arith.constant 4 : index
    %c0_371 = arith.constant 0 : index
    %593 = vector.load %arg6[%c11_369, %c4_370, %c0_371] : memref<14x22x16xf32, #tpu.memory_space<vmem>>, vector<1x16x16xf32>
    %594 = vector.shape_cast %593 : vector<1x16x16xf32> to vector<16x16xf32>
    %595 = vector.broadcast %592 : f32 to vector<16x16xf32>
    %596 = arith.mulf %595, %594 : vector<16x16xf32>
    %597 = arith.addf %573, %596 : vector<16x16xf32>
    %c88 = arith.constant 88 : index
    %598 = memref.load %arg2[%c88] : memref<98xf32, #tpu.memory_space<smem>>
    %c11_372 = arith.constant 11 : index
    %c5_373 = arith.constant 5 : index
    %c0_374 = arith.constant 0 : index
    %599 = vector.load %arg6[%c11_372, %c5_373, %c0_374] : memref<14x22x16xf32, #tpu.memory_space<vmem>>, vector<1x16x16xf32>
    %600 = vector.shape_cast %599 : vector<1x16x16xf32> to vector<16x16xf32>
    %601 = vector.broadcast %598 : f32 to vector<16x16xf32>
    %602 = arith.mulf %601, %600 : vector<16x16xf32>
    %603 = arith.addf %579, %602 : vector<16x16xf32>
    %c95 = arith.constant 95 : index
    %604 = memref.load %arg2[%c95] : memref<98xf32, #tpu.memory_space<smem>>
    %c11_375 = arith.constant 11 : index
    %c6_376 = arith.constant 6 : index
    %c0_377 = arith.constant 0 : index
    %605 = vector.load %arg6[%c11_375, %c6_376, %c0_377] : memref<14x22x16xf32, #tpu.memory_space<vmem>>, vector<1x16x16xf32>
    %606 = vector.shape_cast %605 : vector<1x16x16xf32> to vector<16x16xf32>
    %607 = vector.broadcast %604 : f32 to vector<16x16xf32>
    %608 = arith.mulf %607, %606 : vector<16x16xf32>
    %609 = arith.addf %585, %608 : vector<16x16xf32>
    %c54 = arith.constant 54 : index
    %610 = memref.load %arg2[%c54] : memref<98xf32, #tpu.memory_space<smem>>
    %c12_378 = arith.constant 12 : index
    %c0_379 = arith.constant 0 : index
    %c0_380 = arith.constant 0 : index
    %611 = vector.load %arg6[%c12_378, %c0_379, %c0_380] : memref<14x22x16xf32, #tpu.memory_space<vmem>>, vector<1x16x16xf32>
    %612 = vector.shape_cast %611 : vector<1x16x16xf32> to vector<16x16xf32>
    %613 = vector.broadcast %610 : f32 to vector<16x16xf32>
    %614 = arith.mulf %613, %612 : vector<16x16xf32>
    %615 = arith.addf %591, %614 : vector<16x16xf32>
    %c61 = arith.constant 61 : index
    %616 = memref.load %arg2[%c61] : memref<98xf32, #tpu.memory_space<smem>>
    %c12_381 = arith.constant 12 : index
    %c1_382 = arith.constant 1 : index
    %c0_383 = arith.constant 0 : index
    %617 = vector.load %arg6[%c12_381, %c1_382, %c0_383] : memref<14x22x16xf32, #tpu.memory_space<vmem>>, vector<1x16x16xf32>
    %618 = vector.shape_cast %617 : vector<1x16x16xf32> to vector<16x16xf32>
    %619 = vector.broadcast %616 : f32 to vector<16x16xf32>
    %620 = arith.mulf %619, %618 : vector<16x16xf32>
    %621 = arith.addf %597, %620 : vector<16x16xf32>
    %c68 = arith.constant 68 : index
    %622 = memref.load %arg2[%c68] : memref<98xf32, #tpu.memory_space<smem>>
    %c12_384 = arith.constant 12 : index
    %c2_385 = arith.constant 2 : index
    %c0_386 = arith.constant 0 : index
    %623 = vector.load %arg6[%c12_384, %c2_385, %c0_386] : memref<14x22x16xf32, #tpu.memory_space<vmem>>, vector<1x16x16xf32>
    %624 = vector.shape_cast %623 : vector<1x16x16xf32> to vector<16x16xf32>
    %625 = vector.broadcast %622 : f32 to vector<16x16xf32>
    %626 = arith.mulf %625, %624 : vector<16x16xf32>
    %627 = arith.addf %603, %626 : vector<16x16xf32>
    %c75 = arith.constant 75 : index
    %628 = memref.load %arg2[%c75] : memref<98xf32, #tpu.memory_space<smem>>
    %c12_387 = arith.constant 12 : index
    %c3_388 = arith.constant 3 : index
    %c0_389 = arith.constant 0 : index
    %629 = vector.load %arg6[%c12_387, %c3_388, %c0_389] : memref<14x22x16xf32, #tpu.memory_space<vmem>>, vector<1x16x16xf32>
    %630 = vector.shape_cast %629 : vector<1x16x16xf32> to vector<16x16xf32>
    %631 = vector.broadcast %628 : f32 to vector<16x16xf32>
    %632 = arith.mulf %631, %630 : vector<16x16xf32>
    %633 = arith.addf %609, %632 : vector<16x16xf32>
    %c82 = arith.constant 82 : index
    %634 = memref.load %arg2[%c82] : memref<98xf32, #tpu.memory_space<smem>>
    %c12_390 = arith.constant 12 : index
    %c4_391 = arith.constant 4 : index
    %c0_392 = arith.constant 0 : index
    %635 = vector.load %arg6[%c12_390, %c4_391, %c0_392] : memref<14x22x16xf32, #tpu.memory_space<vmem>>, vector<1x16x16xf32>
    %636 = vector.shape_cast %635 : vector<1x16x16xf32> to vector<16x16xf32>
    %637 = vector.broadcast %634 : f32 to vector<16x16xf32>
    %638 = arith.mulf %637, %636 : vector<16x16xf32>
    %639 = arith.addf %615, %638 : vector<16x16xf32>
    %c89 = arith.constant 89 : index
    %640 = memref.load %arg2[%c89] : memref<98xf32, #tpu.memory_space<smem>>
    %c12_393 = arith.constant 12 : index
    %c5_394 = arith.constant 5 : index
    %c0_395 = arith.constant 0 : index
    %641 = vector.load %arg6[%c12_393, %c5_394, %c0_395] : memref<14x22x16xf32, #tpu.memory_space<vmem>>, vector<1x16x16xf32>
    %642 = vector.shape_cast %641 : vector<1x16x16xf32> to vector<16x16xf32>
    %643 = vector.broadcast %640 : f32 to vector<16x16xf32>
    %644 = arith.mulf %643, %642 : vector<16x16xf32>
    %645 = arith.addf %621, %644 : vector<16x16xf32>
    %c96 = arith.constant 96 : index
    %646 = memref.load %arg2[%c96] : memref<98xf32, #tpu.memory_space<smem>>
    %c12_396 = arith.constant 12 : index
    %c6_397 = arith.constant 6 : index
    %c0_398 = arith.constant 0 : index
    %647 = vector.load %arg6[%c12_396, %c6_397, %c0_398] : memref<14x22x16xf32, #tpu.memory_space<vmem>>, vector<1x16x16xf32>
    %648 = vector.shape_cast %647 : vector<1x16x16xf32> to vector<16x16xf32>
    %649 = vector.broadcast %646 : f32 to vector<16x16xf32>
    %650 = arith.mulf %649, %648 : vector<16x16xf32>
    %651 = arith.addf %627, %650 : vector<16x16xf32>
    %c55 = arith.constant 55 : index
    %652 = memref.load %arg2[%c55] : memref<98xf32, #tpu.memory_space<smem>>
    %c13_399 = arith.constant 13 : index
    %c0_400 = arith.constant 0 : index
    %c0_401 = arith.constant 0 : index
    %653 = vector.load %arg6[%c13_399, %c0_400, %c0_401] : memref<14x22x16xf32, #tpu.memory_space<vmem>>, vector<1x16x16xf32>
    %654 = vector.shape_cast %653 : vector<1x16x16xf32> to vector<16x16xf32>
    %655 = vector.broadcast %652 : f32 to vector<16x16xf32>
    %656 = arith.mulf %655, %654 : vector<16x16xf32>
    %657 = arith.addf %633, %656 : vector<16x16xf32>
    %c62 = arith.constant 62 : index
    %658 = memref.load %arg2[%c62] : memref<98xf32, #tpu.memory_space<smem>>
    %c13_402 = arith.constant 13 : index
    %c1_403 = arith.constant 1 : index
    %c0_404 = arith.constant 0 : index
    %659 = vector.load %arg6[%c13_402, %c1_403, %c0_404] : memref<14x22x16xf32, #tpu.memory_space<vmem>>, vector<1x16x16xf32>
    %660 = vector.shape_cast %659 : vector<1x16x16xf32> to vector<16x16xf32>
    %661 = vector.broadcast %658 : f32 to vector<16x16xf32>
    %662 = arith.mulf %661, %660 : vector<16x16xf32>
    %663 = arith.addf %639, %662 : vector<16x16xf32>
    %c69 = arith.constant 69 : index
    %664 = memref.load %arg2[%c69] : memref<98xf32, #tpu.memory_space<smem>>
    %c13_405 = arith.constant 13 : index
    %c2_406 = arith.constant 2 : index
    %c0_407 = arith.constant 0 : index
    %665 = vector.load %arg6[%c13_405, %c2_406, %c0_407] : memref<14x22x16xf32, #tpu.memory_space<vmem>>, vector<1x16x16xf32>
    %666 = vector.shape_cast %665 : vector<1x16x16xf32> to vector<16x16xf32>
    %667 = vector.broadcast %664 : f32 to vector<16x16xf32>
    %668 = arith.mulf %667, %666 : vector<16x16xf32>
    %669 = arith.addf %645, %668 : vector<16x16xf32>
    %c76 = arith.constant 76 : index
    %670 = memref.load %arg2[%c76] : memref<98xf32, #tpu.memory_space<smem>>
    %c13_408 = arith.constant 13 : index
    %c3_409 = arith.constant 3 : index
    %c0_410 = arith.constant 0 : index
    %671 = vector.load %arg6[%c13_408, %c3_409, %c0_410] : memref<14x22x16xf32, #tpu.memory_space<vmem>>, vector<1x16x16xf32>
    %672 = vector.shape_cast %671 : vector<1x16x16xf32> to vector<16x16xf32>
    %673 = vector.broadcast %670 : f32 to vector<16x16xf32>
    %674 = arith.mulf %673, %672 : vector<16x16xf32>
    %675 = arith.addf %651, %674 : vector<16x16xf32>
    %c83 = arith.constant 83 : index
    %676 = memref.load %arg2[%c83] : memref<98xf32, #tpu.memory_space<smem>>
    %c13_411 = arith.constant 13 : index
    %c4_412 = arith.constant 4 : index
    %c0_413 = arith.constant 0 : index
    %677 = vector.load %arg6[%c13_411, %c4_412, %c0_413] : memref<14x22x16xf32, #tpu.memory_space<vmem>>, vector<1x16x16xf32>
    %678 = vector.shape_cast %677 : vector<1x16x16xf32> to vector<16x16xf32>
    %679 = vector.broadcast %676 : f32 to vector<16x16xf32>
    %680 = arith.mulf %679, %678 : vector<16x16xf32>
    %681 = arith.addf %657, %680 : vector<16x16xf32>
    %c90 = arith.constant 90 : index
    %682 = memref.load %arg2[%c90] : memref<98xf32, #tpu.memory_space<smem>>
    %c13_414 = arith.constant 13 : index
    %c5_415 = arith.constant 5 : index
    %c0_416 = arith.constant 0 : index
    %683 = vector.load %arg6[%c13_414, %c5_415, %c0_416] : memref<14x22x16xf32, #tpu.memory_space<vmem>>, vector<1x16x16xf32>
    %684 = vector.shape_cast %683 : vector<1x16x16xf32> to vector<16x16xf32>
    %685 = vector.broadcast %682 : f32 to vector<16x16xf32>
    %686 = arith.mulf %685, %684 : vector<16x16xf32>
    %687 = arith.addf %663, %686 : vector<16x16xf32>
    %c97 = arith.constant 97 : index
    %688 = memref.load %arg2[%c97] : memref<98xf32, #tpu.memory_space<smem>>
    %c13_417 = arith.constant 13 : index
    %c6_418 = arith.constant 6 : index
    %c0_419 = arith.constant 0 : index
    %689 = vector.load %arg6[%c13_417, %c6_418, %c0_419] : memref<14x22x16xf32, #tpu.memory_space<vmem>>, vector<1x16x16xf32>
    %690 = vector.shape_cast %689 : vector<1x16x16xf32> to vector<16x16xf32>
    %691 = vector.broadcast %688 : f32 to vector<16x16xf32>
    %692 = arith.mulf %691, %690 : vector<16x16xf32>
    %693 = arith.addf %669, %692 : vector<16x16xf32>
    %694 = arith.addf %687, %693 : vector<16x16xf32>
    %695 = arith.addf %675, %681 : vector<16x16xf32>
    %696 = arith.addf %694, %695 : vector<16x16xf32>
    %c0_420 = arith.constant 0 : index
    %697 = memref.load %arg3[%c0_420] : memref<1xf32, #tpu.memory_space<smem>>
    %698 = vector.broadcast %697 : f32 to vector<16x16xf32>
    %699 = arith.addf %696, %698 : vector<16x16xf32>
    %700 = arith.negf %699 : vector<16x16xf32>
    %701 = math.exp %700 : vector<16x16xf32>
    %cst_421 = arith.constant 1.000000e+00 : f32
    %702 = vector.broadcast %cst_421 : f32 to vector<16x16xf32>
    %703 = arith.addf %702, %701 : vector<16x16xf32>
    %704 = arith.divf %702, %703 : vector<16x16xf32>
    %c0_422 = arith.constant 0 : index
    %c0_423 = arith.constant 0 : index
    %c0_424 = arith.constant 0 : index
    %705 = vector.load %arg4[%c0_422, %c0_423, %c0_424] : memref<1x16x16xf32, #tpu.memory_space<vmem>>, vector<1x16x16xf32>
    %706 = vector.shape_cast %705 : vector<1x16x16xf32> to vector<16x16xf32>
    %707 = vector.shape_cast %704 : vector<16x16xf32> to vector<1x16x16xf32>
    tpu.vector_store %arg4[%c0_422, %c0_423, %c0_424], %707 {strides = array<i32>} : memref<1x16x16xf32, #tpu.memory_space<vmem>>, vector<1x16x16xf32>,
    return
  }
  func.func @transform_0(%arg0: i32) -> (i32, i32, i32, i32) {
    %c0_i32 = arith.constant 0 : i32
    %c0_i32_0 = arith.constant 0 : i32
    %c0_i32_1 = arith.constant 0 : i32
    %c0_i32_2 = arith.constant 0 : i32
    return %arg0, %c0_i32, %c0_i32_0, %c0_i32_1 : i32, i32, i32, i32
  }
  func.func @transform_1(%arg0: i32) -> i32 {
    %c0_i32 = arith.constant 0 : i32
    %c0_i32_0 = arith.constant 0 : i32
    return %c0_i32 : i32
  }
  func.func @transform_2(%arg0: i32) -> i32 {
    %c0_i32 = arith.constant 0 : i32
    %c0_i32_0 = arith.constant 0 : i32
    return %c0_i32 : i32
  }
  func.func @transform_3(%arg0: i32) -> (i32, i32, i32) {
    %c0_i32 = arith.constant 0 : i32
    %c0_i32_0 = arith.constant 0 : i32
    %c0_i32_1 = arith.constant 0 : i32
    return %arg0, %c0_i32, %c0_i32_0 : i32, i32, i32
  }
}

</mosaic_0001>

<llo_original>
// kernel: tpu_custom_call.1
$region0: #{tpu_custom_call.1}
  #allocation0 [shape = 'u32[]', space=smem, size = 0x4, offset = 0x4, fixed_abs, tag = 'smem constant byte address 0x4 - core index']
  #allocation1 [shape = 'u32[144,128]{1,0:T(1,128)}', space=vmem, size = 0x12000, scoped, tag = 'internal scratch']
  #allocation2 [shape = 'f32[2,22,22]{2,1,0:T(8,128)}', space=vmem, size = 0x6000, scoped, tag = 'scratch operand']
  #allocation3 [shape = 'f32[14,22,16]{2,1,0:T(8,128)}', space=vmem, size = 0x2a000, scoped, tag = 'scratch operand']
  #allocation4 [shape = 'f32[1]{0:T(128)S(6)}', space=smem, size = 0x200, scoped, tag = 'scoped memory for tpu_custom_call.1']
  %s0 = inlined_call_operand.hbm [shape: f32[2,4,16,16], index: 0, kind: input, shape index: {}]
  %s1 = inlined_call_operand.vmem [shape: f32[98], index: 1, kind: input, shape index: {}]
  %s2 = inlined_call_operand.<no memory space> [shape: f32[1], index: 2, kind: input, shape index: {}]
  %s3 = inlined_call_operand.hbm [shape: f32[2,16,16], index: 3, kind: output, shape index: {}]
  %s4 = sld [smem:[#allocation0]]
  $region53: #{tpu_custom_call.1} parent=0
    _
  %s6 = ssub.s32 1, %s4
  %s7 = scalar_select 0, %s6, %s4
  %8 = sst [smem:[#allocation4]] %s2
  $region1: #{tpu_custom_call.1} parent=0
    #allocation5 [shape = 'u8[65536]{0}', space=vmem, size = 0x10000, scoped, tag = 'input window, operand 0']
    #allocation6 [shape = 's32[2]{0}', space=sflag, size = 0x8, scoped, tag = 'scoped memory for tpu_custom_call.1']
    #allocation7 [shape = 's32[2]{0}', space=sflag, size = 0x8, scoped, tag = 'scoped memory for tpu_custom_call.1']
    #allocation8 [shape = 's32[2]{0}', space=sflag, size = 0x8, scoped, tag = 'scoped memory for tpu_custom_call.1']
    #allocation9 [shape = 'u8[512]{0}', space=smem, size = 0x200, scoped, tag = 'input window, operand 1, single buffered']
    #allocation10 [shape = 'u8[16384]{0}', space=vmem, size = 0x4000, scoped, tag = 'output window, operand 0']
    %9 = vsyncpa [#allocation6], 0
    %s10 = scalar_lea.sflag [#allocation6], 1
    %11 = vsyncpa %s10, 0
    %12 = vsyncpa [#allocation8], 0
    %13 = vsyncpa [#allocation7], 0
    %s14 = scalar_lea.sflag [#allocation7], 1
    %15 = vsyncpa %s14, 0
    loop: start=0, step=1, limit=4
    $region2: #{tpu_custom_call.1} parent=1 // loop_pre_header
      _
    $region3: #{tpu_custom_call.1} parent=1 // loop_header
      %s17 = sphi 0, %s21
      %p18 = scmp.ge.s32.totalorder %s17, 4
      %s27 = sphi 0, %s29
      %s30 = sphi 0, %s27
      %s31 = sphi 0, %s30
      %s47 = sphi 0, %s31
      %s51 = sphi 0, %s51
      %s53 = sphi 0, %s51
      %s54 = sphi 0, %s53
      %s68 = sphi 0, %s54
      %s72 = sphi 0, %s72
      %s74 = sphi 0, %s72
      %s75 = sphi 0, %s74
      %s89 = sphi 0, %s75
      %s95 = sphi 0, %s97
      %s98 = sphi 0, %s95
      %s99 = sphi 0, %s98
      %s115 = sphi 0, %s99
    $region4: #{tpu_custom_call.1} parent=1 // loop_header_branch
      %20 = sbr.rel (%p18) target = $region8
    $region5: #{tpu_custom_call.1} parent=1 // loop_body
      %s22 = ssub.s32 %s17, 1
      %s23 = ssub.s32 %s17, 2
      %s24 = sadd.s32 %s17, 1
      %s25 = ssub.s32 %s17, %s24
      %p26 = scmp.eq.s32.totalorder %s25, 0
      %s28 = sadd.s32 %s27, 1
      %s29 = scalar_select %p26, %s27, %s28
      %p32 = pneg %p26
      %p33 = scmp.eq.s32.totalorder %s17, 1
      %p34 = por %p32, %p33
      %p35 = scmp.ne.s32.totalorder %s27, %s30
      %p36 = scmp.eq.s32.totalorder %s17, 0
      %p37 = por %p35, %p36
      %p38 = scmp.ne.s32.totalorder %s27, %s30
      %p39 = scmp.eq.s32.totalorder %s22, 1
      %p40 = por %p38, %p39
      %p41 = scmp.ne.s32.totalorder %s30, %s31
      %p42 = scmp.eq.s32.totalorder %s22, 0
      %p43 = por %p41, %p42
      %p44 = scmp.ne.s32.totalorder %s30, %s31
      %p45 = scmp.eq.s32.totalorder %s23, 1
      %p46 = por %p44, %p45
      %p48 = scmp.ne.s32.totalorder %s31, %s47
      %p49 = scmp.eq.s32.totalorder %s23, 0
      %p50 = por %p48, %p49
      %s52 = sadd.s32 %s51, 1
      %p55 = scmp.eq.s32.totalorder %s17, 1
      %p56 = scmp.ne.s32.totalorder %s51, %s53
      %p57 = scmp.eq.s32.totalorder %s17, 0
      %p58 = por %p56, %p57
      %p59 = scmp.ne.s32.totalorder %s51, %s53
      %p60 = scmp.eq.s32.totalorder %s22, 1
      %p61 = por %p59, %p60
      %p62 = scmp.ne.s32.totalorder %s53, %s54
      %p63 = scmp.eq.s32.totalorder %s22, 0
      %p64 = por %p62, %p63
      %p65 = scmp.ne.s32.totalorder %s53, %s54
      %p66 = scmp.eq.s32.totalorder %s23, 1
      %p67 = por %p65, %p66
      %p69 = scmp.ne.s32.totalorder %s54, %s68
      %p70 = scmp.eq.s32.totalorder %s23, 0
      %p71 = por %p69, %p70
      %s73 = sadd.s32 %s72, 1
      %p76 = scmp.eq.s32.totalorder %s17, 1
      %p77 = scmp.ne.s32.totalorder %s72, %s74
      %p78 = scmp.eq.s32.totalorder %s17, 0
      %p79 = por %p77, %p78
      %p80 = scmp.ne.s32.totalorder %s72, %s74
      %p81 = scmp.eq.s32.totalorder %s22, 1
      %p82 = por %p80, %p81
      %p83 = scmp.ne.s32.totalorder %s74, %s75
      %p84 = scmp.eq.s32.totalorder %s22, 0
      %p85 = por %p83, %p84
      %p86 = scmp.ne.s32.totalorder %s74, %s75
      %p87 = scmp.eq.s32.totalorder %s23, 1
      %p88 = por %p86, %p87
      %p90 = scmp.ne.s32.totalorder %s75, %s89
      %p91 = scmp.eq.s32.totalorder %s23, 0
      %p92 = por %p90, %p91
      %s93 = ssub.s32 %s17, %s24
      %p94 = scmp.eq.s32.totalorder %s93, 0
      %s96 = sadd.s32 %s95, 1
      %s97 = scalar_select %p94, %s95, %s96
      %p100 = pneg %p94
      %p101 = scmp.eq.s32.totalorder %s17, 1
      %p102 = por %p100, %p101
      %p103 = scmp.ne.s32.totalorder %s95, %s98
      %p104 = scmp.eq.s32.totalorder %s17, 0
      %p105 = por %p103, %p104
      %p106 = scmp.ne.s32.totalorder %s95, %s98
      %p107 = scmp.eq.s32.totalorder %s22, 1
      %p108 = por %p106, %p107
      %p109 = scmp.ne.s32.totalorder %s98, %s99
      %p110 = scmp.eq.s32.totalorder %s22, 0
      %p111 = por %p109, %p110
      %p112 = scmp.ne.s32.totalorder %s98, %s99
      %p113 = scmp.eq.s32.totalorder %s23, 1
      %p114 = por %p112, %p113
      %p116 = scmp.ne.s32.totalorder %s99, %s115
      %p117 = scmp.eq.s32.totalorder %s23, 0
      %p118 = por %p116, %p117
      %p119 = scmp.le.s32.totalorder 1, %s17
      %p120 = scmp.lt.s32.totalorder %s17, 3
      %p121 = pnand %p119, %p120
      %p122 = pneg %p121
      // Predicated region
      $region9: #{tpu_custom_call.1} parent=5 // pred_check
        _
      $region10: #{tpu_custom_call.1} parent=5 // pred_check_branch
        %124 = sbr.rel (%p121) target = $region12
      $region11: #{tpu_custom_call.1} parent=5 // pred_region
        %s125 = ssub.s32 %s17, 1
        // Predicated region
        $region13: #{tpu_custom_call.1} parent=11 // pred_check
          %p126 = pneg %p64
        $region14: #{tpu_custom_call.1} parent=11 // pred_check_branch
          %128 = sbr.rel (%p126) target = $region16
        $region15: #{tpu_custom_call.1} parent=11 // pred_region
          %s130 = ssub.s32 16, 16
          %131 = vsyncadd [#allocation8], %s130
          %s133 = sshll.u32 %s1, 4
          %s134 = int_to_ptr.vmem [resolvable:$true] %s133
          %136 = dma.vmem_to_smem %s134, 16, [#allocation9], [#allocation8]
        $region16: #{tpu_custom_call.1} parent=11 // pred_fallthru
          _
        // Predicated region
        $region17: #{tpu_custom_call.1} parent=11 // pred_check
          %p137 = pneg %p85
        $region18: #{tpu_custom_call.1} parent=11 // pred_check_branch
          %139 = sbr.rel (%p137) target = $region20
        $region19: #{tpu_custom_call.1} parent=11 // pred_region
          _
        $region20: #{tpu_custom_call.1} parent=11 // pred_fallthru
          _
      $region12: #{tpu_custom_call.1} parent=5 // pred_fallthru
        _
      %p140 = scmp.lt.s32.totalorder %s17, 2
      // Predicated region
      $region21: #{tpu_custom_call.1} parent=5 // pred_check
        %p141 = pneg %p140
      $region22: #{tpu_custom_call.1} parent=5 // pred_check_branch
        %143 = sbr.rel (%p141) target = $region24
      $region23: #{tpu_custom_call.1} parent=5 // pred_region
        // Predicated region
        $region25: #{tpu_custom_call.1} parent=23 // pred_check
          %p144 = pneg %p37
        $region26: #{tpu_custom_call.1} parent=23 // pred_check_branch
          %146 = sbr.rel (%p144) target = $region28
        $region27: #{tpu_custom_call.1} parent=23 // pred_region
          %s147 = sand.u32 %s27, 1
          %s148 = scalar_lea.sflag [#allocation6], %s147
          %s149 = sand.u32 %s27, 1
          %s150 = smul.addr %s149, 64
          %s151 = scalar_lea.vmem [#allocation5], %s150
          %s153 = ssub.s32 1024, 1024
          %154 = vsyncadd %s148, %s153
          %s155 = smul.addr %s17, 8
          %s156 = smul.addr %s155, 128
          %s157 = scalar_lea.hbm %s0, %s156
          %s158 = sshll.u32 %s151, 4
          %s159 = int_to_ptr.vmem [resolvable:$true] %s158
          %164 = dma.hbm_to_vmem [thread:$0]  %s157, 1024, %s159, %s148, 128, 128, 8
        $region28: #{tpu_custom_call.1} parent=23 // pred_fallthru
          _
      $region24: #{tpu_custom_call.1} parent=5 // pred_fallthru
        _
      %p165 = scmp.le.s32.totalorder 1, %s17
      %p166 = scmp.lt.s32.totalorder %s17, 3
      %p167 = pnand %p165, %p166
      %p168 = pneg %p167
      // Predicated region
      $region29: #{tpu_custom_call.1} parent=5 // pred_check
        _
      $region30: #{tpu_custom_call.1} parent=5 // pred_check_branch
        %170 = sbr.rel (%p167) target = $region32
      $region31: #{tpu_custom_call.1} parent=5 // pred_region
        %s171 = ssub.s32 %s17, 1
        %s172 = sand.u32 %s30, 1
        %s173 = scalar_lea.sflag [#allocation6], %s172
        %s174 = sand.u32 %s30, 1
        %s175 = smul.addr %s174, 64
        %s176 = scalar_lea.vmem [#allocation5], %s175
        // Predicated region
        $region33: #{tpu_custom_call.1} parent=31 // pred_check
          %p177 = pneg %p43
        $region34: #{tpu_custom_call.1} parent=31 // pred_check_branch
          %179 = sbr.rel (%p177) target = $region36
        $region35: #{tpu_custom_call.1} parent=31 // pred_region
          %180 = dma.done %s173, 1024
        $region36: #{tpu_custom_call.1} parent=31 // pred_fallthru
          _
        // Predicated region
        $region37: #{tpu_custom_call.1} parent=31 // pred_check
          %p181 = pneg %p64
        $region38: #{tpu_custom_call.1} parent=31 // pred_check_branch
          %183 = sbr.rel (%p181) target = $region40
        $region39: #{tpu_custom_call.1} parent=31 // pred_region
          %184 = dma.done [#allocation8], 16
        $region40: #{tpu_custom_call.1} parent=31 // pred_fallthru
          _
        %185 = sfence
        %s186 = sand.u32 %s30, 1
        %s187 = scalar_lea.sflag [#allocation6], %s186
        %s188 = sand.u32 %s30, 1
        %s189 = smul.addr %s188, 64
        %s190 = scalar_lea.vmem [#allocation5], %s189
        %p191 = pneg %p43
        %p192 = pneg %p40
        %p193 = pneg %p64
        %p194 = pneg %p61
        %p195 = pneg %p85
        %p196 = pneg %p82
        %p197 = pneg %p111
        %p198 = pneg %p108
        %s199 = sand.u32 %s98, 1
        %s200 = scalar_lea.sflag [#allocation7], %s199
        %s201 = sand.u32 %s98, 1
        %s202 = smul.addr %s201, 16
        %s203 = scalar_lea.vmem [#allocation10], %s202
        %v204 = vld [vmem:[%s176] sm:$0xff]
        %v205 = vld [vmem:[%s176 + $0x8] sm:$0xff]
        %s206 = scalar_lea.vmem %s176, 16 [#allocation5]
        %v207 = vld [vmem:[%s206] sm:$0xff]
        %v208 = vld [vmem:[%s206 + $0x8] sm:$0xff]
        %v209 = vadd.f32 %v204, %v207
        %v210 = vadd.f32 %v205, %v208
        %v211 = vmax.f32 %v204, %v207
        %v212 = vmax.f32 %v205, %v208
        %s213 = scalar_lea.vmem %s176, 32 [#allocation5]
        %v214 = vld [vmem:[%s213] sm:$0xff]
        %v215 = vld [vmem:[%s213 + $0x8] sm:$0xff]
        %v216 = vadd.f32 %v209, %v214
        %v217 = vadd.f32 %v210, %v215
        %v218 = vmax.f32 %v211, %v214
        %v219 = vmax.f32 %v212, %v215
        %s220 = scalar_lea.vmem %s176, 48 [#allocation5]
        %v221 = vld [vmem:[%s220] sm:$0xff]
        %v222 = vld [vmem:[%s220 + $0x8] sm:$0xff]
        %v223 = vadd.f32 %v216, %v221
        %v224 = vadd.f32 %v217, %v222
        %v225 = vmax.f32 %v218, %v221
        %v226 = vmax.f32 %v219, %v222
        %v227 = vmul.f32 %v223, 0.25
        %v228 = vmul.f32 %v224, 0.25
        %vm229 = vcmask 174080
        %230 = vst.msk [vmem:[#allocation2] sm:$0x7] %vm229, 0.0
        %231 = vst.msk [vmem:[#allocation2 + $0x18] sm:$0x7] %vm229, 0.0
        %232 = vst.msk [vmem:[#allocation2 + $0x13] sm:$0x7] %vm229, 0.0
        %233 = vst.msk [vmem:[#allocation2 + $0x2b] sm:$0x7] %vm229, 0.0
        %vm234 = vcmask 23552
        %235 = vst.msk [vmem:[#allocation2 + $0x3] sm:$0xff] %vm234, 0.0
        %236 = vst.msk [vmem:[#allocation2 + $0xb] sm:$0xff] %vm234, 0.0
        %237 = vst.msk [vmem:[#allocation2 + $0x1b] sm:$0xff] %vm234, 0.0
        %238 = vst.msk [vmem:[#allocation2 + $0x23] sm:$0xff] %vm234, 0.0
        %vm239 = vcmask 179352
        %240 = vst.msk [vmem:[#allocation2 + $0x3] sm:$0xff] %vm239, 0.0
        %241 = vst.msk [vmem:[#allocation2 + $0xb] sm:$0xff] %vm239, 0.0
        %242 = vst.msk [vmem:[#allocation2 + $0x1b] sm:$0xff] %vm239, 0.0
        %243 = vst.msk [vmem:[#allocation2 + $0x23] sm:$0xff] %vm239, 0.0
        %246 = vrot.lane.b32.xlu0 %v227, 3
        %v247 = vpop.permute.xlu0 %246
        %248 = vrot.lane.b32.xlu0 %v228, 3
        %v249 = vpop.permute.xlu0 %248
        %vm252 = vcmask 154648
        %253 = vst.msk [vmem:[#allocation2 + $0x3] sm:$0xff] %vm252, %v247
        %254 = vst.msk [vmem:[#allocation2 + $0xb] sm:$0xff] %vm252, %v249
        %257 = vrot.lane.b32.xlu0 %v225, 3
        %v258 = vpop.permute.xlu0 %257
        %259 = vrot.lane.b32.xlu0 %v226, 3
        %v260 = vpop.permute.xlu0 %259
        %s263 = scalar_lea.vmem [#allocation2], 24
        %264 = vst.msk [vmem:[%s263 + $0x3] sm:$0xff] %vm252, %v258
        %265 = vst.msk [vmem:[%s263 + $0xb] sm:$0xff] %vm252, %v260
        %v266 = vld [vmem:[#allocation2] sm:$0xff]
        %v267 = vld [vmem:[#allocation2 + $0x8] sm:$0xff]
        %v268 = vld [vmem:[#allocation2 + $0x10] sm:$0x3f]
        %vm269 = vcmask 130048
        %270 = vst.msk [vmem:[#allocation3] sm:$0xff] %vm269, %v266
        %271 = vst.msk [vmem:[#allocation3 + $0x8] sm:$0xff] %vm269, %v267
        %vm272 = vcmask 128000
        %273 = vst.msk [vmem:[#allocation3 + $0x10] sm:$0x3f] %vm272, %v268
        %v274 = vld [vmem:[#allocation2] sm:$0xff]
        %v275 = vld [vmem:[#allocation2 + $0x8] sm:$0xff]
        %v276 = vld [vmem:[#allocation2 + $0x10] sm:$0x3f]
        %280 = vrot.lane.b32.xlu0 %v274, 127
        %v281 = vpop.permute.xlu0 %280
        %282 = vrot.lane.b32.xlu0 %v275, 127
        %v283 = vpop.permute.xlu0 %282
        %284 = vrot.lane.b32.xlu0 %v276, 127
        %v285 = vpop.permute.xlu0 %284
        %s289 = scalar_lea.vmem [#allocation3], 24
        %290 = vst.msk [vmem:[%s289] sm:$0xff] %vm269, %v281
        %291 = vst.msk [vmem:[%s289 + $0x8] sm:$0xff] %vm269, %v283
        %292 = vst.msk [vmem:[%s289 + $0x10] sm:$0x3f] %vm272, %v285
        %v293 = vld [vmem:[#allocation2] sm:$0xff]
        %v294 = vld [vmem:[#allocation2 + $0x8] sm:$0xff]
        %v295 = vld [vmem:[#allocation2 + $0x10] sm:$0x3f]
        %299 = vrot.lane.b32.xlu0 %v293, 126
        %v300 = vpop.permute.xlu0 %299
        %301 = vrot.lane.b32.xlu0 %v294, 126
        %v302 = vpop.permute.xlu0 %301
        %303 = vrot.lane.b32.xlu0 %v295, 126
        %v304 = vpop.permute.xlu0 %303
        %s308 = scalar_lea.vmem [#allocation3], 48
        %309 = vst.msk [vmem:[%s308] sm:$0xff] %vm269, %v300
        %310 = vst.msk [vmem:[%s308 + $0x8] sm:$0xff] %vm269, %v302
        %311 = vst.msk [vmem:[%s308 + $0x10] sm:$0x3f] %vm272, %v304
        %v312 = vld [vmem:[#allocation2] sm:$0xff]
        %v313 = vld [vmem:[#allocation2 + $0x8] sm:$0xff]
        %v314 = vld [vmem:[#allocation2 + $0x10] sm:$0x3f]
        %318 = vrot.lane.b32.xlu0 %v312, 125
        %v319 = vpop.permute.xlu0 %318
        %320 = vrot.lane.b32.xlu0 %v313, 125
        %v321 = vpop.permute.xlu0 %320
        %322 = vrot.lane.b32.xlu0 %v314, 125
        %v323 = vpop.permute.xlu0 %322
        %s327 = scalar_lea.vmem [#allocation3], 72
        %328 = vst.msk [vmem:[%s327] sm:$0xff] %vm269, %v319
        %329 = vst.msk [vmem:[%s327 + $0x8] sm:$0xff] %vm269, %v321
        %330 = vst.msk [vmem:[%s327 + $0x10] sm:$0x3f] %vm272, %v323
        %v331 = vld [vmem:[#allocation2] sm:$0xff]
        %v332 = vld [vmem:[#allocation2 + $0x8] sm:$0xff]
        %v333 = vld [vmem:[#allocation2 + $0x10] sm:$0x3f]
        %337 = vrot.lane.b32.xlu0 %v331, 124
        %v338 = vpop.permute.xlu0 %337
        %339 = vrot.lane.b32.xlu0 %v332, 124
        %v340 = vpop.permute.xlu0 %339
        %341 = vrot.lane.b32.xlu0 %v333, 124
        %v342 = vpop.permute.xlu0 %341
        %s346 = scalar_lea.vmem [#allocation3], 96
        %347 = vst.msk [vmem:[%s346] sm:$0xff] %vm269, %v338
        %348 = vst.msk [vmem:[%s346 + $0x8] sm:$0xff] %vm269, %v340
        %349 = vst.msk [vmem:[%s346 + $0x10] sm:$0x3f] %vm272, %v342
        %v350 = vld [vmem:[#allocation2] sm:$0xff]
        %v351 = vld [vmem:[#allocation2 + $0x8] sm:$0xff]
        %v352 = vld [vmem:[#allocation2 + $0x10] sm:$0x3f]
        %356 = vrot.lane.b32.xlu0 %v350, 123
        %v357 = vpop.permute.xlu0 %356
        %358 = vrot.lane.b32.xlu0 %v351, 123
        %v359 = vpop.permute.xlu0 %358
        %360 = vrot.lane.b32.xlu0 %v352, 123
        %v361 = vpop.permute.xlu0 %360
        %s365 = scalar_lea.vmem [#allocation3], 120
        %366 = vst.msk [vmem:[%s365] sm:$0xff] %vm269, %v357
        %367 = vst.msk [vmem:[%s365 + $0x8] sm:$0xff] %vm269, %v359
        %368 = vst.msk [vmem:[%s365 + $0x10] sm:$0x3f] %vm272, %v361
        %v369 = vld [vmem:[#allocation2] sm:$0xff]
        %v370 = vld [vmem:[#allocation2 + $0x8] sm:$0xff]
        %v371 = vld [vmem:[#allocation2 + $0x10] sm:$0x3f]
        %375 = vrot.lane.b32.xlu0 %v369, 122
        %v376 = vpop.permute.xlu0 %375
        %377 = vrot.lane.b32.xlu0 %v370, 122
        %v378 = vpop.permute.xlu0 %377
        %379 = vrot.lane.b32.xlu0 %v371, 122
        %v380 = vpop.permute.xlu0 %379
        %s384 = scalar_lea.vmem [#allocation3], 144
        %385 = vst.msk [vmem:[%s384] sm:$0xff] %vm269, %v376
        %386 = vst.msk [vmem:[%s384 + $0x8] sm:$0xff] %vm269, %v378
        %387 = vst.msk [vmem:[%s384 + $0x10] sm:$0x3f] %vm272, %v380
        %v388 = vld [vmem:[%s263] sm:$0xff]
        %v389 = vld [vmem:[%s263 + $0x8] sm:$0xff]
        %v390 = vld [vmem:[%s263 + $0x10] sm:$0x3f]
        %s391 = scalar_lea.vmem [#allocation3], 168
        %392 = vst.msk [vmem:[%s391] sm:$0xff] %vm269, %v388
        %393 = vst.msk [vmem:[%s391 + $0x8] sm:$0xff] %vm269, %v389
        %394 = vst.msk [vmem:[%s391 + $0x10] sm:$0x3f] %vm272, %v390
        %v395 = vld [vmem:[%s263] sm:$0xff]
        %v396 = vld [vmem:[%s263 + $0x8] sm:$0xff]
        %v397 = vld [vmem:[%s263 + $0x10] sm:$0x3f]
        %401 = vrot.lane.b32.xlu0 %v395, 127
        %v402 = vpop.permute.xlu0 %401
        %403 = vrot.lane.b32.xlu0 %v396, 127
        %v404 = vpop.permute.xlu0 %403
        %405 = vrot.lane.b32.xlu0 %v397, 127
        %v406 = vpop.permute.xlu0 %405
        %s410 = scalar_lea.vmem [#allocation3], 192
        %411 = vst.msk [vmem:[%s410] sm:$0xff] %vm269, %v402
        %412 = vst.msk [vmem:[%s410 + $0x8] sm:$0xff] %vm269, %v404
        %413 = vst.msk [vmem:[%s410 + $0x10] sm:$0x3f] %vm272, %v406
        %v414 = vld [vmem:[%s263] sm:$0xff]
        %v415 = vld [vmem:[%s263 + $0x8] sm:$0xff]
        %v416 = vld [vmem:[%s263 + $0x10] sm:$0x3f]
        %420 = vrot.lane.b32.xlu0 %v414, 126
        %v421 = vpop.permute.xlu0 %420
        %422 = vrot.lane.b32.xlu0 %v415, 126
        %v423 = vpop.permute.xlu0 %422
        %424 = vrot.lane.b32.xlu0 %v416, 126
        %v425 = vpop.permute.xlu0 %424
        %s429 = scalar_lea.vmem [#allocation3], 216
        %430 = vst.msk [vmem:[%s429] sm:$0xff] %vm269, %v421
        %431 = vst.msk [vmem:[%s429 + $0x8] sm:$0xff] %vm269, %v423
        %432 = vst.msk [vmem:[%s429 + $0x10] sm:$0x3f] %vm272, %v425
        %v433 = vld [vmem:[%s263] sm:$0xff]
        %v434 = vld [vmem:[%s263 + $0x8] sm:$0xff]
        %v435 = vld [vmem:[%s263 + $0x10] sm:$0x3f]
        %439 = vrot.lane.b32.xlu0 %v433, 125
        %v440 = vpop.permute.xlu0 %439
        %441 = vrot.lane.b32.xlu0 %v434, 125
        %v442 = vpop.permute.xlu0 %441
        %443 = vrot.lane.b32.xlu0 %v435, 125
        %v444 = vpop.permute.xlu0 %443
        %s448 = scalar_lea.vmem [#allocation3], 240
        %449 = vst.msk [vmem:[%s448] sm:$0xff] %vm269, %v440
        %450 = vst.msk [vmem:[%s448 + $0x8] sm:$0xff] %vm269, %v442
        %451 = vst.msk [vmem:[%s448 + $0x10] sm:$0x3f] %vm272, %v444
        %v452 = vld [vmem:[%s263] sm:$0xff]
        %v453 = vld [vmem:[%s263 + $0x8] sm:$0xff]
        %v454 = vld [vmem:[%s263 + $0x10] sm:$0x3f]
        %458 = vrot.lane.b32.xlu0 %v452, 124
        %v459 = vpop.permute.xlu0 %458
        %460 = vrot.lane.b32.xlu0 %v453, 124
        %v461 = vpop.permute.xlu0 %460
        %462 = vrot.lane.b32.xlu0 %v454, 124
        %v463 = vpop.permute.xlu0 %462
        %s467 = scalar_lea.vmem [#allocation3], 264
        %468 = vst.msk [vmem:[%s467] sm:$0xff] %vm269, %v459
        %469 = vst.msk [vmem:[%s467 + $0x8] sm:$0xff] %vm269, %v461
        %470 = vst.msk [vmem:[%s467 + $0x10] sm:$0x3f] %vm272, %v463
        %v471 = vld [vmem:[%s263] sm:$0xff]
        %v472 = vld [vmem:[%s263 + $0x8] sm:$0xff]
        %v473 = vld [vmem:[%s263 + $0x10] sm:$0x3f]
        %477 = vrot.lane.b32.xlu0 %v471, 123
        %v478 = vpop.permute.xlu0 %477
        %479 = vrot.lane.b32.xlu0 %v472, 123
        %v480 = vpop.permute.xlu0 %479
        %481 = vrot.lane.b32.xlu0 %v473, 123
        %v482 = vpop.permute.xlu0 %481
        %s486 = scalar_lea.vmem [#allocation3], 288
        %487 = vst.msk [vmem:[%s486] sm:$0xff] %vm269, %v478
        %488 = vst.msk [vmem:[%s486 + $0x8] sm:$0xff] %vm269, %v480
        %489 = vst.msk [vmem:[%s486 + $0x10] sm:$0x3f] %vm272, %v482
        %v490 = vld [vmem:[%s263] sm:$0xff]
        %v491 = vld [vmem:[%s263 + $0x8] sm:$0xff]
        %v492 = vld [vmem:[%s263 + $0x10] sm:$0x3f]
        %496 = vrot.lane.b32.xlu0 %v490, 122
        %v497 = vpop.permute.xlu0 %496
        %498 = vrot.lane.b32.xlu0 %v491, 122
        %v499 = vpop.permute.xlu0 %498
        %500 = vrot.lane.b32.xlu0 %v492, 122
        %v501 = vpop.permute.xlu0 %500
        %s505 = scalar_lea.vmem [#allocation3], 312
        %506 = vst.msk [vmem:[%s505] sm:$0xff] %vm269, %v497
        %507 = vst.msk [vmem:[%s505 + $0x8] sm:$0xff] %vm269, %v499
        %508 = vst.msk [vmem:[%s505 + $0x10] sm:$0x3f] %vm272, %v501
        %s509 = sld [smem:[#allocation9]]
        %v510 = vld [vmem:[#allocation3] sm:$0xff]
        %v511 = vld [vmem:[#allocation3 + $0x8] sm:$0xff]
        %v512 = vstv %s509
        %v513 = vmul.f32 %v512, %v510
        %v514 = vmul.f32 %v512, %v511
        %v515 = vadd.f32 %v513, 0.0
        %v516 = vadd.f32 %v514, 0.0
        %s517 = sld [smem:[#allocation9 + $0x7]]
        %v518 = vld [vmem:[#allocation3 + $0x1] sm:$0xff]
        %v519 = vld [vmem:[#allocation3 + $0x9] sm:$0xff]
        %v520 = vstv %s517
        %v521 = vmul.f32 %v520, %v518
        %v522 = vmul.f32 %v520, %v519
        %v523 = vadd.f32 %v521, 0.0
        %v524 = vadd.f32 %v522, 0.0
        %s525 = sld [smem:[#allocation9 + $0xe]]
        %v526 = vld [vmem:[#allocation3 + $0x2] sm:$0xff]
        %v527 = vld [vmem:[#allocation3 + $0xa] sm:$0xff]
        %v528 = vstv %s525
        %v529 = vmul.f32 %v528, %v526
        %v530 = vmul.f32 %v528, %v527
        %v531 = vadd.f32 %v529, 0.0
        %v532 = vadd.f32 %v530, 0.0
        %s533 = sld [smem:[#allocation9 + $0x15]]
        %v534 = vld [vmem:[#allocation3 + $0x3] sm:$0xff]
        %v535 = vld [vmem:[#allocation3 + $0xb] sm:$0xff]
        %v536 = vstv %s533
        %v537 = vmul.f32 %v536, %v534
        %v538 = vmul.f32 %v536, %v535
        %v539 = vadd.f32 %v537, 0.0
        %v540 = vadd.f32 %v538, 0.0
        %s541 = sld [smem:[#allocation9 + $0x1c]]
        %v542 = vld [vmem:[#allocation3 + $0x4] sm:$0xff]
        %v543 = vld [vmem:[#allocation3 + $0xc] sm:$0xff]
        %v544 = vstv %s541
        %v545 = vmul.f32 %v544, %v542
        %v546 = vmul.f32 %v544, %v543
        %v547 = vadd.f32 %v515, %v545
        %v548 = vadd.f32 %v516, %v546
        %s549 = sld [smem:[#allocation9 + $0x23]]
        %v550 = vld [vmem:[#allocation3 + $0x5] sm:$0xff]
        %v551 = vld [vmem:[#allocation3 + $0xd] sm:$0xff]
        %v552 = vstv %s549
        %v553 = vmul.f32 %v552, %v550
        %v554 = vmul.f32 %v552, %v551
        %v555 = vadd.f32 %v523, %v553
        %v556 = vadd.f32 %v524, %v554
        %s557 = sld [smem:[#allocation9 + $0x2a]]
        %v558 = vld [vmem:[#allocation3 + $0x6] sm:$0xff]
        %v559 = vld [vmem:[#allocation3 + $0xe] sm:$0xff]
        %v560 = vstv %s557
        %v561 = vmul.f32 %v560, %v558
        %v562 = vmul.f32 %v560, %v559
        %v563 = vadd.f32 %v531, %v561
        %v564 = vadd.f32 %v532, %v562
        %s565 = sld [smem:[#allocation9 + $0x1]]
        %v566 = vld [vmem:[%s289] sm:$0xff]
        %v567 = vld [vmem:[%s289 + $0x8] sm:$0xff]
        %v568 = vstv %s565
        %v569 = vmul.f32 %v568, %v566
        %v570 = vmul.f32 %v568, %v567
        %v571 = vadd.f32 %v539, %v569
        %v572 = vadd.f32 %v540, %v570
        %s573 = sld [smem:[#allocation9 + $0x8]]
        %v574 = vld [vmem:[%s289 + $0x1] sm:$0xff]
        %v575 = vld [vmem:[%s289 + $0x9] sm:$0xff]
        %v576 = vstv %s573
        %v577 = vmul.f32 %v576, %v574
        %v578 = vmul.f32 %v576, %v575
        %v579 = vadd.f32 %v547, %v577
        %v580 = vadd.f32 %v548, %v578
        %s581 = sld [smem:[#allocation9 + $0xf]]
        %v582 = vld [vmem:[%s289 + $0x2] sm:$0xff]
        %v583 = vld [vmem:[%s289 + $0xa] sm:$0xff]
        %v584 = vstv %s581
        %v585 = vmul.f32 %v584, %v582
        %v586 = vmul.f32 %v584, %v583
        %v587 = vadd.f32 %v555, %v585
        %v588 = vadd.f32 %v556, %v586
        %s589 = sld [smem:[#allocation9 + $0x16]]
        %v590 = vld [vmem:[%s289 + $0x3] sm:$0xff]
        %v591 = vld [vmem:[%s289 + $0xb] sm:$0xff]
        %v592 = vstv %s589
        %v593 = vmul.f32 %v592, %v590
        %v594 = vmul.f32 %v592, %v591
        %v595 = vadd.f32 %v563, %v593
        %v596 = vadd.f32 %v564, %v594
        %s597 = sld [smem:[#allocation9 + $0x1d]]
        %v598 = vld [vmem:[%s289 + $0x4] sm:$0xff]
        %v599 = vld [vmem:[%s289 + $0xc] sm:$0xff]
        %v600 = vstv %s597
        %v601 = vmul.f32 %v600, %v598
        %v602 = vmul.f32 %v600, %v599
        %v603 = vadd.f32 %v571, %v601
        %v604 = vadd.f32 %v572, %v602
        %s605 = sld [smem:[#allocation9 + $0x24]]
        %v606 = vld [vmem:[%s289 + $0x5] sm:$0xff]
        %v607 = vld [vmem:[%s289 + $0xd] sm:$0xff]
        %v608 = vstv %s605
        %v609 = vmul.f32 %v608, %v606
        %v610 = vmul.f32 %v608, %v607
        %v611 = vadd.f32 %v579, %v609
        %v612 = vadd.f32 %v580, %v610
        %s613 = sld [smem:[#allocation9 + $0x2b]]
        %v614 = vld [vmem:[%s289 + $0x6] sm:$0xff]
        %v615 = vld [vmem:[%s289 + $0xe] sm:$0xff]
        %v616 = vstv %s613
        %v617 = vmul.f32 %v616, %v614
        %v618 = vmul.f32 %v616, %v615
        %v619 = vadd.f32 %v587, %v617
        %v620 = vadd.f32 %v588, %v618
        %s621 = sld [smem:[#allocation9 + $0x2]]
        %v622 = vld [vmem:[%s308] sm:$0xff]
        %v623 = vld [vmem:[%s308 + $0x8] sm:$0xff]
        %v624 = vstv %s621
        %v625 = vmul.f32 %v624, %v622
        %v626 = vmul.f32 %v624, %v623
        %v627 = vadd.f32 %v595, %v625
        %v628 = vadd.f32 %v596, %v626
        %s629 = sld [smem:[#allocation9 + $0x9]]
        %v630 = vld [vmem:[%s308 + $0x1] sm:$0xff]
        %v631 = vld [vmem:[%s308 + $0x9] sm:$0xff]
        %v632 = vstv %s629
        %v633 = vmul.f32 %v632, %v630
        %v634 = vmul.f32 %v632, %v631
        %v635 = vadd.f32 %v603, %v633
        %v636 = vadd.f32 %v604, %v634
        %s637 = sld [smem:[#allocation9 + $0x10]]
        %v638 = vld [vmem:[%s308 + $0x2] sm:$0xff]
        %v639 = vld [vmem:[%s308 + $0xa] sm:$0xff]
        %v640 = vstv %s637
        %v641 = vmul.f32 %v640, %v638
        %v642 = vmul.f32 %v640, %v639
        %v643 = vadd.f32 %v611, %v641
        %v644 = vadd.f32 %v612, %v642
        %s645 = sld [smem:[#allocation9 + $0x17]]
        %v646 = vld [vmem:[%s308 + $0x3] sm:$0xff]
        %v647 = vld [vmem:[%s308 + $0xb] sm:$0xff]
        %v648 = vstv %s645
        %v649 = vmul.f32 %v648, %v646
        %v650 = vmul.f32 %v648, %v647
        %v651 = vadd.f32 %v619, %v649
        %v652 = vadd.f32 %v620, %v650
        %s653 = sld [smem:[#allocation9 + $0x1e]]
        %v654 = vld [vmem:[%s308 + $0x4] sm:$0xff]
        %v655 = vld [vmem:[%s308 + $0xc] sm:$0xff]
        %v656 = vstv %s653
        %v657 = vmul.f32 %v656, %v654
        %v658 = vmul.f32 %v656, %v655
        %v659 = vadd.f32 %v627, %v657
        %v660 = vadd.f32 %v628, %v658
        %s661 = sld [smem:[#allocation9 + $0x25]]
        %v662 = vld [vmem:[%s308 + $0x5] sm:$0xff]
        %v663 = vld [vmem:[%s308 + $0xd] sm:$0xff]
        %v664 = vstv %s661
        %v665 = vmul.f32 %v664, %v662
        %v666 = vmul.f32 %v664, %v663
        %v667 = vadd.f32 %v635, %v665
        %v668 = vadd.f32 %v636, %v666
        %s669 = sld [smem:[#allocation9 + $0x2c]]
        %v670 = vld [vmem:[%s308 + $0x6] sm:$0xff]
        %v671 = vld [vmem:[%s308 + $0xe] sm:$0xff]
        %v672 = vstv %s669
        %v673 = vmul.f32 %v672, %v670
        %v674 = vmul.f32 %v672, %v671
        %v675 = vadd.f32 %v643, %v673
        %v676 = vadd.f32 %v644, %v674
        %s677 = sld [smem:[#allocation9 + $0x3]]
        %v678 = vld [vmem:[%s327] sm:$0xff]
        %v679 = vld [vmem:[%s327 + $0x8] sm:$0xff]
        %v680 = vstv %s677
        %v681 = vmul.f32 %v680, %v678
        %v682 = vmul.f32 %v680, %v679
        %v683 = vadd.f32 %v651, %v681
        %v684 = vadd.f32 %v652, %v682
        %s685 = sld [smem:[#allocation9 + $0xa]]
        %v686 = vld [vmem:[%s327 + $0x1] sm:$0xff]
        %v687 = vld [vmem:[%s327 + $0x9] sm:$0xff]
        %v688 = vstv %s685
        %v689 = vmul.f32 %v688, %v686
        %v690 = vmul.f32 %v688, %v687
        %v691 = vadd.f32 %v659, %v689
        %v692 = vadd.f32 %v660, %v690
        %s693 = sld [smem:[#allocation9 + $0x11]]
        %v694 = vld [vmem:[%s327 + $0x2] sm:$0xff]
        %v695 = vld [vmem:[%s327 + $0xa] sm:$0xff]
        %v696 = vstv %s693
        %v697 = vmul.f32 %v696, %v694
        %v698 = vmul.f32 %v696, %v695
        %v699 = vadd.f32 %v667, %v697
        %v700 = vadd.f32 %v668, %v698
        %s701 = sld [smem:[#allocation9 + $0x18]]
        %v702 = vld [vmem:[%s327 + $0x3] sm:$0xff]
        %v703 = vld [vmem:[%s327 + $0xb] sm:$0xff]
        %v704 = vstv %s701
        %v705 = vmul.f32 %v704, %v702
        %v706 = vmul.f32 %v704, %v703
        %v707 = vadd.f32 %v675, %v705
        %v708 = vadd.f32 %v676, %v706
        %s709 = sld [smem:[#allocation9 + $0x1f]]
        %v710 = vld [vmem:[%s327 + $0x4] sm:$0xff]
        %v711 = vld [vmem:[%s327 + $0xc] sm:$0xff]
        %v712 = vstv %s709
        %v713 = vmul.f32 %v712, %v710
        %v714 = vmul.f32 %v712, %v711
        %v715 = vadd.f32 %v683, %v713
        %v716 = vadd.f32 %v684, %v714
        %s717 = sld [smem:[#allocation9 + $0x26]]
        %v718 = vld [vmem:[%s327 + $0x5] sm:$0xff]
        %v719 = vld [vmem:[%s327 + $0xd] sm:$0xff]
        %v720 = vstv %s717
        %v721 = vmul.f32 %v720, %v718
        %v722 = vmul.f32 %v720, %v719
        %v723 = vadd.f32 %v691, %v721
        %v724 = vadd.f32 %v692, %v722
        %s725 = sld [smem:[#allocation9 + $0x2d]]
        %v726 = vld [vmem:[%s327 + $0x6] sm:$0xff]
        %v727 = vld [vmem:[%s327 + $0xe] sm:$0xff]
        %v728 = vstv %s725
        %v729 = vmul.f32 %v728, %v726
        %v730 = vmul.f32 %v728, %v727
        %v731 = vadd.f32 %v699, %v729
        %v732 = vadd.f32 %v700, %v730
        %s733 = sld [smem:[#allocation9 + $0x4]]
        %v734 = vld [vmem:[%s346] sm:$0xff]
        %v735 = vld [vmem:[%s346 + $0x8] sm:$0xff]
        %v736 = vstv %s733
        %v737 = vmul.f32 %v736, %v734
        %v738 = vmul.f32 %v736, %v735
        %v739 = vadd.f32 %v707, %v737
        %v740 = vadd.f32 %v708, %v738
        %s741 = sld [smem:[#allocation9 + $0xb]]
        %v742 = vld [vmem:[%s346 + $0x1] sm:$0xff]
        %v743 = vld [vmem:[%s346 + $0x9] sm:$0xff]
        %v744 = vstv %s741
        %v745 = vmul.f32 %v744, %v742
        %v746 = vmul.f32 %v744, %v743
        %v747 = vadd.f32 %v715, %v745
        %v748 = vadd.f32 %v716, %v746
        %s749 = sld [smem:[#allocation9 + $0x12]]
        %v750 = vld [vmem:[%s346 + $0x2] sm:$0xff]
        %v751 = vld [vmem:[%s346 + $0xa] sm:$0xff]
        %v752 = vstv %s749
        %v753 = vmul.f32 %v752, %v750
        %v754 = vmul.f32 %v752, %v751
        %v755 = vadd.f32 %v723, %v753
        %v756 = vadd.f32 %v724, %v754
        %s757 = sld [smem:[#allocation9 + $0x19]]
        %v758 = vld [vmem:[%s346 + $0x3] sm:$0xff]
        %v759 = vld [vmem:[%s346 + $0xb] sm:$0xff]
        %v760 = vstv %s757
        %v761 = vmul.f32 %v760, %v758
        %v762 = vmul.f32 %v760, %v759
        %v763 = vadd.f32 %v731, %v761
        %v764 = vadd.f32 %v732, %v762
        %s765 = sld [smem:[#allocation9 + $0x20]]
        %v766 = vld [vmem:[%s346 + $0x4] sm:$0xff]
        %v767 = vld [vmem:[%s346 + $0xc] sm:$0xff]
        %v768 = vstv %s765
        %v769 = vmul.f32 %v768, %v766
        %v770 = vmul.f32 %v768, %v767
        %v771 = vadd.f32 %v739, %v769
        %v772 = vadd.f32 %v740, %v770
        %s773 = sld [smem:[#allocation9 + $0x27]]
        %v774 = vld [vmem:[%s346 + $0x5] sm:$0xff]
        %v775 = vld [vmem:[%s346 + $0xd] sm:$0xff]
        %v776 = vstv %s773
        %v777 = vmul.f32 %v776, %v774
        %v778 = vmul.f32 %v776, %v775
        %v779 = vadd.f32 %v747, %v777
        %v780 = vadd.f32 %v748, %v778
        %s781 = sld [smem:[#allocation9 + $0x2e]]
        %v782 = vld [vmem:[%s346 + $0x6] sm:$0xff]
        %v783 = vld [vmem:[%s346 + $0xe] sm:$0xff]
        %v784 = vstv %s781
        %v785 = vmul.f32 %v784, %v782
        %v786 = vmul.f32 %v784, %v783
        %v787 = vadd.f32 %v755, %v785
        %v788 = vadd.f32 %v756, %v786
        %s789 = sld [smem:[#allocation9 + $0x5]]
        %v790 = vld [vmem:[%s365] sm:$0xff]
        %v791 = vld [vmem:[%s365 + $0x8] sm:$0xff]
        %v792 = vstv %s789
        %v793 = vmul.f32 %v792, %v790
        %v794 = vmul.f32 %v792, %v791
        %v795 = vadd.f32 %v763, %v793
        %v796 = vadd.f32 %v764, %v794
        %s797 = sld [smem:[#allocation9 + $0xc]]
        %v798 = vld [vmem:[%s365 + $0x1] sm:$0xff]
        %v799 = vld [vmem:[%s365 + $0x9] sm:$0xff]
        %v800 = vstv %s797
        %v801 = vmul.f32 %v800, %v798
        %v802 = vmul.f32 %v800, %v799
        %v803 = vadd.f32 %v771, %v801
        %v804 = vadd.f32 %v772, %v802
        %s805 = sld [smem:[#allocation9 + $0x13]]
        %v806 = vld [vmem:[%s365 + $0x2] sm:$0xff]
        %v807 = vld [vmem:[%s365 + $0xa] sm:$0xff]
        %v808 = vstv %s805
        %v809 = vmul.f32 %v808, %v806
        %v810 = vmul.f32 %v808, %v807
        %v811 = vadd.f32 %v779, %v809
        %v812 = vadd.f32 %v780, %v810
        %s813 = sld [smem:[#allocation9 + $0x1a]]
        %v814 = vld [vmem:[%s365 + $0x3] sm:$0xff]
        %v815 = vld [vmem:[%s365 + $0xb] sm:$0xff]
        %v816 = vstv %s813
        %v817 = vmul.f32 %v816, %v814
        %v818 = vmul.f32 %v816, %v815
        %v819 = vadd.f32 %v787, %v817
        %v820 = vadd.f32 %v788, %v818
        %s821 = sld [smem:[#allocation9 + $0x21]]
        %v822 = vld [vmem:[%s365 + $0x4] sm:$0xff]
        %v823 = vld [vmem:[%s365 + $0xc] sm:$0xff]
        %v824 = vstv %s821
        %v825 = vmul.f32 %v824, %v822
        %v826 = vmul.f32 %v824, %v823
        %v827 = vadd.f32 %v795, %v825
        %v828 = vadd.f32 %v796, %v826
        %s829 = sld [smem:[#allocation9 + $0x28]]
        %v830 = vld [vmem:[%s365 + $0x5] sm:$0xff]
        %v831 = vld [vmem:[%s365 + $0xd] sm:$0xff]
        %v832 = vstv %s829
        %v833 = vmul.f32 %v832, %v830
        %v834 = vmul.f32 %v832, %v831
        %v835 = vadd.f32 %v803, %v833
        %v836 = vadd.f32 %v804, %v834
        %s837 = sld [smem:[#allocation9 + $0x2f]]
        %v838 = vld [vmem:[%s365 + $0x6] sm:$0xff]
        %v839 = vld [vmem:[%s365 + $0xe] sm:$0xff]
        %v840 = vstv %s837
        %v841 = vmul.f32 %v840, %v838
        %v842 = vmul.f32 %v840, %v839
        %v843 = vadd.f32 %v811, %v841
        %v844 = vadd.f32 %v812, %v842
        %s845 = sld [smem:[#allocation9 + $0x6]]
        %v846 = vld [vmem:[%s384] sm:$0xff]
        %v847 = vld [vmem:[%s384 + $0x8] sm:$0xff]
        %v848 = vstv %s845
        %v849 = vmul.f32 %v848, %v846
        %v850 = vmul.f32 %v848, %v847
        %v851 = vadd.f32 %v819, %v849
        %v852 = vadd.f32 %v820, %v850
        %s853 = sld [smem:[#allocation9 + $0xd]]
        %v854 = vld [vmem:[%s384 + $0x1] sm:$0xff]
        %v855 = vld [vmem:[%s384 + $0x9] sm:$0xff]
        %v856 = vstv %s853
        %v857 = vmul.f32 %v856, %v854
        %v858 = vmul.f32 %v856, %v855
        %v859 = vadd.f32 %v827, %v857
        %v860 = vadd.f32 %v828, %v858
        %s861 = sld [smem:[#allocation9 + $0x14]]
        %v862 = vld [vmem:[%s384 + $0x2] sm:$0xff]
        %v863 = vld [vmem:[%s384 + $0xa] sm:$0xff]
        %v864 = vstv %s861
        %v865 = vmul.f32 %v864, %v862
        %v866 = vmul.f32 %v864, %v863
        %v867 = vadd.f32 %v835, %v865
        %v868 = vadd.f32 %v836, %v866
        %s869 = sld [smem:[#allocation9 + $0x1b]]
        %v870 = vld [vmem:[%s384 + $0x3] sm:$0xff]
        %v871 = vld [vmem:[%s384 + $0xb] sm:$0xff]
        %v872 = vstv %s869
        %v873 = vmul.f32 %v872, %v870
        %v874 = vmul.f32 %v872, %v871
        %v875 = vadd.f32 %v843, %v873
        %v876 = vadd.f32 %v844, %v874
        %s877 = sld [smem:[#allocation9 + $0x22]]
        %v878 = vld [vmem:[%s384 + $0x4] sm:$0xff]
        %v879 = vld [vmem:[%s384 + $0xc] sm:$0xff]
        %v880 = vstv %s877
        %v881 = vmul.f32 %v880, %v878
        %v882 = vmul.f32 %v880, %v879
        %v883 = vadd.f32 %v851, %v881
        %v884 = vadd.f32 %v852, %v882
        %s885 = sld [smem:[#allocation9 + $0x29]]
        %v886 = vld [vmem:[%s384 + $0x5] sm:$0xff]
        %v887 = vld [vmem:[%s384 + $0xd] sm:$0xff]
        %v888 = vstv %s885
        %v889 = vmul.f32 %v888, %v886
        %v890 = vmul.f32 %v888, %v887
        %v891 = vadd.f32 %v859, %v889
        %v892 = vadd.f32 %v860, %v890
        %s893 = sld [smem:[#allocation9 + $0x30]]
        %v894 = vld [vmem:[%s384 + $0x6] sm:$0xff]
        %v895 = vld [vmem:[%s384 + $0xe] sm:$0xff]
        %v896 = vstv %s893
        %v897 = vmul.f32 %v896, %v894
        %v898 = vmul.f32 %v896, %v895
        %v899 = vadd.f32 %v867, %v897
        %v900 = vadd.f32 %v868, %v898
        %s901 = sld [smem:[#allocation9 + $0x31]]
        %v902 = vld [vmem:[%s391] sm:$0xff]
        %v903 = vld [vmem:[%s391 + $0x8] sm:$0xff]
        %v904 = vstv %s901
        %v905 = vmul.f32 %v904, %v902
        %v906 = vmul.f32 %v904, %v903
        %v907 = vadd.f32 %v875, %v905
        %v908 = vadd.f32 %v876, %v906
        %s909 = sld [smem:[#allocation9 + $0x38]]
        %v910 = vld [vmem:[%s391 + $0x1] sm:$0xff]
        %v911 = vld [vmem:[%s391 + $0x9] sm:$0xff]
        %v912 = vstv %s909
        %v913 = vmul.f32 %v912, %v910
        %v914 = vmul.f32 %v912, %v911
        %v915 = vadd.f32 %v883, %v913
        %v916 = vadd.f32 %v884, %v914
        %s917 = sld [smem:[#allocation9 + $0x3f]]
        %v918 = vld [vmem:[%s391 + $0x2] sm:$0xff]
        %v919 = vld [vmem:[%s391 + $0xa] sm:$0xff]
        %v920 = vstv %s917
        %v921 = vmul.f32 %v920, %v918
        %v922 = vmul.f32 %v920, %v919
        %v923 = vadd.f32 %v891, %v921
        %v924 = vadd.f32 %v892, %v922
        %s925 = sld [smem:[#allocation9 + $0x46]]
        %v926 = vld [vmem:[%s391 + $0x3] sm:$0xff]
        %v927 = vld [vmem:[%s391 + $0xb] sm:$0xff]
        %v928 = vstv %s925
        %v929 = vmul.f32 %v928, %v926
        %v930 = vmul.f32 %v928, %v927
        %v931 = vadd.f32 %v899, %v929
        %v932 = vadd.f32 %v900, %v930
        %s933 = sld [smem:[#allocation9 + $0x4d]]
        %v934 = vld [vmem:[%s391 + $0x4] sm:$0xff]
        %v935 = vld [vmem:[%s391 + $0xc] sm:$0xff]
        %v936 = vstv %s933
        %v937 = vmul.f32 %v936, %v934
        %v938 = vmul.f32 %v936, %v935
        %v939 = vadd.f32 %v907, %v937
        %v940 = vadd.f32 %v908, %v938
        %s941 = sld [smem:[#allocation9 + $0x54]]
        %v942 = vld [vmem:[%s391 + $0x5] sm:$0xff]
        %v943 = vld [vmem:[%s391 + $0xd] sm:$0xff]
        %v944 = vstv %s941
        %v945 = vmul.f32 %v944, %v942
        %v946 = vmul.f32 %v944, %v943
        %v947 = vadd.f32 %v915, %v945
        %v948 = vadd.f32 %v916, %v946
        %s949 = sld [smem:[#allocation9 + $0x5b]]
        %v950 = vld [vmem:[%s391 + $0x6] sm:$0xff]
        %v951 = vld [vmem:[%s391 + $0xe] sm:$0xff]
        %v952 = vstv %s949
        %v953 = vmul.f32 %v952, %v950
        %v954 = vmul.f32 %v952, %v951
        %v955 = vadd.f32 %v923, %v953
        %v956 = vadd.f32 %v924, %v954
        %s957 = sld [smem:[#allocation9 + $0x32]]
        %v958 = vld [vmem:[%s410] sm:$0xff]
        %v959 = vld [vmem:[%s410 + $0x8] sm:$0xff]
        %v960 = vstv %s957
        %v961 = vmul.f32 %v960, %v958
        %v962 = vmul.f32 %v960, %v959
        %v963 = vadd.f32 %v931, %v961
        %v964 = vadd.f32 %v932, %v962
        %s965 = sld [smem:[#allocation9 + $0x39]]
        %v966 = vld [vmem:[%s410 + $0x1] sm:$0xff]
        %v967 = vld [vmem:[%s410 + $0x9] sm:$0xff]
        %v968 = vstv %s965
        %v969 = vmul.f32 %v968, %v966
        %v970 = vmul.f32 %v968, %v967
        %v971 = vadd.f32 %v939, %v969
        %v972 = vadd.f32 %v940, %v970
        %s973 = sld [smem:[#allocation9 + $0x40]]
        %v974 = vld [vmem:[%s410 + $0x2] sm:$0xff]
        %v975 = vld [vmem:[%s410 + $0xa] sm:$0xff]
        %v976 = vstv %s973
        %v977 = vmul.f32 %v976, %v974
        %v978 = vmul.f32 %v976, %v975
        %v979 = vadd.f32 %v947, %v977
        %v980 = vadd.f32 %v948, %v978
        %s981 = sld [smem:[#allocation9 + $0x47]]
        %v982 = vld [vmem:[%s410 + $0x3] sm:$0xff]
        %v983 = vld [vmem:[%s410 + $0xb] sm:$0xff]
        %v984 = vstv %s981
        %v985 = vmul.f32 %v984, %v982
        %v986 = vmul.f32 %v984, %v983
        %v987 = vadd.f32 %v955, %v985
        %v988 = vadd.f32 %v956, %v986
        %s989 = sld [smem:[#allocation9 + $0x4e]]
        %v990 = vld [vmem:[%s410 + $0x4] sm:$0xff]
        %v991 = vld [vmem:[%s410 + $0xc] sm:$0xff]
        %v992 = vstv %s989
        %v993 = vmul.f32 %v992, %v990
        %v994 = vmul.f32 %v992, %v991
        %v995 = vadd.f32 %v963, %v993
        %v996 = vadd.f32 %v964, %v994
        %s997 = sld [smem:[#allocation9 + $0x55]]
        %v998 = vld [vmem:[%s410 + $0x5] sm:$0xff]
        %v999 = vld [vmem:[%s410 + $0xd] sm:$0xff]
        %v1000 = vstv %s997
        %v1001 = vmul.f32 %v1000, %v998
        %v1002 = vmul.f32 %v1000, %v999
        %v1003 = vadd.f32 %v971, %v1001
        %v1004 = vadd.f32 %v972, %v1002
        %s1005 = sld [smem:[#allocation9 + $0x5c]]
        %v1006 = vld [vmem:[%s410 + $0x6] sm:$0xff]
        %v1007 = vld [vmem:[%s410 + $0xe] sm:$0xff]
        %v1008 = vstv %s1005
        %v1009 = vmul.f32 %v1008, %v1006
        %v1010 = vmul.f32 %v1008, %v1007
        %v1011 = vadd.f32 %v979, %v1009
        %v1012 = vadd.f32 %v980, %v1010
        %s1013 = sld [smem:[#allocation9 + $0x33]]
        %v1014 = vld [vmem:[%s429] sm:$0xff]
        %v1015 = vld [vmem:[%s429 + $0x8] sm:$0xff]
        %v1016 = vstv %s1013
        %v1017 = vmul.f32 %v1016, %v1014
        %v1018 = vmul.f32 %v1016, %v1015
        %v1019 = vadd.f32 %v987, %v1017
        %v1020 = vadd.f32 %v988, %v1018
        %s1021 = sld [smem:[#allocation9 + $0x3a]]
        %v1022 = vld [vmem:[%s429 + $0x1] sm:$0xff]
        %v1023 = vld [vmem:[%s429 + $0x9] sm:$0xff]
        %v1024 = vstv %s1021
        %v1025 = vmul.f32 %v1024, %v1022
        %v1026 = vmul.f32 %v1024, %v1023
        %v1027 = vadd.f32 %v995, %v1025
        %v1028 = vadd.f32 %v996, %v1026
        %s1029 = sld [smem:[#allocation9 + $0x41]]
        %v1030 = vld [vmem:[%s429 + $0x2] sm:$0xff]
        %v1031 = vld [vmem:[%s429 + $0xa] sm:$0xff]
        %v1032 = vstv %s1029
        %v1033 = vmul.f32 %v1032, %v1030
        %v1034 = vmul.f32 %v1032, %v1031
        %v1035 = vadd.f32 %v1003, %v1033
        %v1036 = vadd.f32 %v1004, %v1034
        %s1037 = sld [smem:[#allocation9 + $0x48]]
        %v1038 = vld [vmem:[%s429 + $0x3] sm:$0xff]
        %v1039 = vld [vmem:[%s429 + $0xb] sm:$0xff]
        %v1040 = vstv %s1037
        %v1041 = vmul.f32 %v1040, %v1038
        %v1042 = vmul.f32 %v1040, %v1039
        %v1043 = vadd.f32 %v1011, %v1041
        %v1044 = vadd.f32 %v1012, %v1042
        %s1045 = sld [smem:[#allocation9 + $0x4f]]
        %v1046 = vld [vmem:[%s429 + $0x4] sm:$0xff]
        %v1047 = vld [vmem:[%s429 + $0xc] sm:$0xff]
        %v1048 = vstv %s1045
        %v1049 = vmul.f32 %v1048, %v1046
        %v1050 = vmul.f32 %v1048, %v1047
        %v1051 = vadd.f32 %v1019, %v1049
        %v1052 = vadd.f32 %v1020, %v1050
        %s1053 = sld [smem:[#allocation9 + $0x56]]
        %v1054 = vld [vmem:[%s429 + $0x5] sm:$0xff]
        %v1055 = vld [vmem:[%s429 + $0xd] sm:$0xff]
        %v1056 = vstv %s1053
        %v1057 = vmul.f32 %v1056, %v1054
        %v1058 = vmul.f32 %v1056, %v1055
        %v1059 = vadd.f32 %v1027, %v1057
        %v1060 = vadd.f32 %v1028, %v1058
        %s1061 = sld [smem:[#allocation9 + $0x5d]]
        %v1062 = vld [vmem:[%s429 + $0x6] sm:$0xff]
        %v1063 = vld [vmem:[%s429 + $0xe] sm:$0xff]
        %v1064 = vstv %s1061
        %v1065 = vmul.f32 %v1064, %v1062
        %v1066 = vmul.f32 %v1064, %v1063
        %v1067 = vadd.f32 %v1035, %v1065
        %v1068 = vadd.f32 %v1036, %v1066
        %s1069 = sld [smem:[#allocation9 + $0x34]]
        %v1070 = vld [vmem:[%s448] sm:$0xff]
        %v1071 = vld [vmem:[%s448 + $0x8] sm:$0xff]
        %v1072 = vstv %s1069
        %v1073 = vmul.f32 %v1072, %v1070
        %v1074 = vmul.f32 %v1072, %v1071
        %v1075 = vadd.f32 %v1043, %v1073
        %v1076 = vadd.f32 %v1044, %v1074
        %s1077 = sld [smem:[#allocation9 + $0x3b]]
        %v1078 = vld [vmem:[%s448 + $0x1] sm:$0xff]
        %v1079 = vld [vmem:[%s448 + $0x9] sm:$0xff]
        %v1080 = vstv %s1077
        %v1081 = vmul.f32 %v1080, %v1078
        %v1082 = vmul.f32 %v1080, %v1079
        %v1083 = vadd.f32 %v1051, %v1081
        %v1084 = vadd.f32 %v1052, %v1082
        %s1085 = sld [smem:[#allocation9 + $0x42]]
        %v1086 = vld [vmem:[%s448 + $0x2] sm:$0xff]
        %v1087 = vld [vmem:[%s448 + $0xa] sm:$0xff]
        %v1088 = vstv %s1085
        %v1089 = vmul.f32 %v1088, %v1086
        %v1090 = vmul.f32 %v1088, %v1087
        %v1091 = vadd.f32 %v1059, %v1089
        %v1092 = vadd.f32 %v1060, %v1090
        %s1093 = sld [smem:[#allocation9 + $0x49]]
        %v1094 = vld [vmem:[%s448 + $0x3] sm:$0xff]
        %v1095 = vld [vmem:[%s448 + $0xb] sm:$0xff]
        %v1096 = vstv %s1093
        %v1097 = vmul.f32 %v1096, %v1094
        %v1098 = vmul.f32 %v1096, %v1095
        %v1099 = vadd.f32 %v1067, %v1097
        %v1100 = vadd.f32 %v1068, %v1098
        %s1101 = sld [smem:[#allocation9 + $0x50]]
        %v1102 = vld [vmem:[%s448 + $0x4] sm:$0xff]
        %v1103 = vld [vmem:[%s448 + $0xc] sm:$0xff]
        %v1104 = vstv %s1101
        %v1105 = vmul.f32 %v1104, %v1102
        %v1106 = vmul.f32 %v1104, %v1103
        %v1107 = vadd.f32 %v1075, %v1105
        %v1108 = vadd.f32 %v1076, %v1106
        %s1109 = sld [smem:[#allocation9 + $0x57]]
        %v1110 = vld [vmem:[%s448 + $0x5] sm:$0xff]
        %v1111 = vld [vmem:[%s448 + $0xd] sm:$0xff]
        %v1112 = vstv %s1109
        %v1113 = vmul.f32 %v1112, %v1110
        %v1114 = vmul.f32 %v1112, %v1111
        %v1115 = vadd.f32 %v1083, %v1113
        %v1116 = vadd.f32 %v1084, %v1114
        %s1117 = sld [smem:[#allocation9 + $0x5e]]
        %v1118 = vld [vmem:[%s448 + $0x6] sm:$0xff]
        %v1119 = vld [vmem:[%s448 + $0xe] sm:$0xff]
        %v1120 = vstv %s1117
        %v1121 = vmul.f32 %v1120, %v1118
        %v1122 = vmul.f32 %v1120, %v1119
        %v1123 = vadd.f32 %v1091, %v1121
        %v1124 = vadd.f32 %v1092, %v1122
        %s1125 = sld [smem:[#allocation9 + $0x35]]
        %v1126 = vld [vmem:[%s467] sm:$0xff]
        %v1127 = vld [vmem:[%s467 + $0x8] sm:$0xff]
        %v1128 = vstv %s1125
        %v1129 = vmul.f32 %v1128, %v1126
        %v1130 = vmul.f32 %v1128, %v1127
        %v1131 = vadd.f32 %v1099, %v1129
        %v1132 = vadd.f32 %v1100, %v1130
        %s1133 = sld [smem:[#allocation9 + $0x3c]]
        %v1134 = vld [vmem:[%s467 + $0x1] sm:$0xff]
        %v1135 = vld [vmem:[%s467 + $0x9] sm:$0xff]
        %v1136 = vstv %s1133
        %v1137 = vmul.f32 %v1136, %v1134
        %v1138 = vmul.f32 %v1136, %v1135
        %v1139 = vadd.f32 %v1107, %v1137
        %v1140 = vadd.f32 %v1108, %v1138
        %s1141 = sld [smem:[#allocation9 + $0x43]]
        %v1142 = vld [vmem:[%s467 + $0x2] sm:$0xff]
        %v1143 = vld [vmem:[%s467 + $0xa] sm:$0xff]
        %v1144 = vstv %s1141
        %v1145 = vmul.f32 %v1144, %v1142
        %v1146 = vmul.f32 %v1144, %v1143
        %v1147 = vadd.f32 %v1115, %v1145
        %v1148 = vadd.f32 %v1116, %v1146
        %s1149 = sld [smem:[#allocation9 + $0x4a]]
        %v1150 = vld [vmem:[%s467 + $0x3] sm:$0xff]
        %v1151 = vld [vmem:[%s467 + $0xb] sm:$0xff]
        %v1152 = vstv %s1149
        %v1153 = vmul.f32 %v1152, %v1150
        %v1154 = vmul.f32 %v1152, %v1151
        %v1155 = vadd.f32 %v1123, %v1153
        %v1156 = vadd.f32 %v1124, %v1154
        %s1157 = sld [smem:[#allocation9 + $0x51]]
        %v1158 = vld [vmem:[%s467 + $0x4] sm:$0xff]
        %v1159 = vld [vmem:[%s467 + $0xc] sm:$0xff]
        %v1160 = vstv %s1157
        %v1161 = vmul.f32 %v1160, %v1158
        %v1162 = vmul.f32 %v1160, %v1159
        %v1163 = vadd.f32 %v1131, %v1161
        %v1164 = vadd.f32 %v1132, %v1162
        %s1165 = sld [smem:[#allocation9 + $0x58]]
        %v1166 = vld [vmem:[%s467 + $0x5] sm:$0xff]
        %v1167 = vld [vmem:[%s467 + $0xd] sm:$0xff]
        %v1168 = vstv %s1165
        %v1169 = vmul.f32 %v1168, %v1166
        %v1170 = vmul.f32 %v1168, %v1167
        %v1171 = vadd.f32 %v1139, %v1169
        %v1172 = vadd.f32 %v1140, %v1170
        %s1173 = sld [smem:[#allocation9 + $0x5f]]
        %v1174 = vld [vmem:[%s467 + $0x6] sm:$0xff]
        %v1175 = vld [vmem:[%s467 + $0xe] sm:$0xff]
        %v1176 = vstv %s1173
        %v1177 = vmul.f32 %v1176, %v1174
        %v1178 = vmul.f32 %v1176, %v1175
        %v1179 = vadd.f32 %v1147, %v1177
        %v1180 = vadd.f32 %v1148, %v1178
        %s1181 = sld [smem:[#allocation9 + $0x36]]
        %v1182 = vld [vmem:[%s486] sm:$0xff]
        %v1183 = vld [vmem:[%s486 + $0x8] sm:$0xff]
        %v1184 = vstv %s1181
        %v1185 = vmul.f32 %v1184, %v1182
        %v1186 = vmul.f32 %v1184, %v1183
        %v1187 = vadd.f32 %v1155, %v1185
        %v1188 = vadd.f32 %v1156, %v1186
        %s1189 = sld [smem:[#allocation9 + $0x3d]]
        %v1190 = vld [vmem:[%s486 + $0x1] sm:$0xff]
        %v1191 = vld [vmem:[%s486 + $0x9] sm:$0xff]
        %v1192 = vstv %s1189
        %v1193 = vmul.f32 %v1192, %v1190
        %v1194 = vmul.f32 %v1192, %v1191
        %v1195 = vadd.f32 %v1163, %v1193
        %v1196 = vadd.f32 %v1164, %v1194
        %s1197 = sld [smem:[#allocation9 + $0x44]]
        %v1198 = vld [vmem:[%s486 + $0x2] sm:$0xff]
        %v1199 = vld [vmem:[%s486 + $0xa] sm:$0xff]
        %v1200 = vstv %s1197
        %v1201 = vmul.f32 %v1200, %v1198
        %v1202 = vmul.f32 %v1200, %v1199
        %v1203 = vadd.f32 %v1171, %v1201
        %v1204 = vadd.f32 %v1172, %v1202
        %s1205 = sld [smem:[#allocation9 + $0x4b]]
        %v1206 = vld [vmem:[%s486 + $0x3] sm:$0xff]
        %v1207 = vld [vmem:[%s486 + $0xb] sm:$0xff]
        %v1208 = vstv %s1205
        %v1209 = vmul.f32 %v1208, %v1206
        %v1210 = vmul.f32 %v1208, %v1207
        %v1211 = vadd.f32 %v1179, %v1209
        %v1212 = vadd.f32 %v1180, %v1210
        %s1213 = sld [smem:[#allocation9 + $0x52]]
        %v1214 = vld [vmem:[%s486 + $0x4] sm:$0xff]
        %v1215 = vld [vmem:[%s486 + $0xc] sm:$0xff]
        %v1216 = vstv %s1213
        %v1217 = vmul.f32 %v1216, %v1214
        %v1218 = vmul.f32 %v1216, %v1215
        %v1219 = vadd.f32 %v1187, %v1217
        %v1220 = vadd.f32 %v1188, %v1218
        %s1221 = sld [smem:[#allocation9 + $0x59]]
        %v1222 = vld [vmem:[%s486 + $0x5] sm:$0xff]
        %v1223 = vld [vmem:[%s486 + $0xd] sm:$0xff]
        %v1224 = vstv %s1221
        %v1225 = vmul.f32 %v1224, %v1222
        %v1226 = vmul.f32 %v1224, %v1223
        %v1227 = vadd.f32 %v1195, %v1225
        %v1228 = vadd.f32 %v1196, %v1226
        %s1229 = sld [smem:[#allocation9 + $0x60]]
        %v1230 = vld [vmem:[%s486 + $0x6] sm:$0xff]
        %v1231 = vld [vmem:[%s486 + $0xe] sm:$0xff]
        %v1232 = vstv %s1229
        %v1233 = vmul.f32 %v1232, %v1230
        %v1234 = vmul.f32 %v1232, %v1231
        %v1235 = vadd.f32 %v1203, %v1233
        %v1236 = vadd.f32 %v1204, %v1234
        %s1237 = sld [smem:[#allocation9 + $0x37]]
        %v1238 = vld [vmem:[%s505] sm:$0xff]
        %v1239 = vld [vmem:[%s505 + $0x8] sm:$0xff]
        %v1240 = vstv %s1237
        %v1241 = vmul.f32 %v1240, %v1238
        %v1242 = vmul.f32 %v1240, %v1239
        %v1243 = vadd.f32 %v1211, %v1241
        %v1244 = vadd.f32 %v1212, %v1242
        %s1245 = sld [smem:[#allocation9 + $0x3e]]
        %v1246 = vld [vmem:[%s505 + $0x1] sm:$0xff]
        %v1247 = vld [vmem:[%s505 + $0x9] sm:$0xff]
        %v1248 = vstv %s1245
        %v1249 = vmul.f32 %v1248, %v1246
        %v1250 = vmul.f32 %v1248, %v1247
        %v1251 = vadd.f32 %v1219, %v1249
        %v1252 = vadd.f32 %v1220, %v1250
        %s1253 = sld [smem:[#allocation9 + $0x45]]
        %v1254 = vld [vmem:[%s505 + $0x2] sm:$0xff]
        %v1255 = vld [vmem:[%s505 + $0xa] sm:$0xff]
        %v1256 = vstv %s1253
        %v1257 = vmul.f32 %v1256, %v1254
        %v1258 = vmul.f32 %v1256, %v1255
        %v1259 = vadd.f32 %v1227, %v1257
        %v1260 = vadd.f32 %v1228, %v1258
        %s1261 = sld [smem:[#allocation9 + $0x4c]]
        %v1262 = vld [vmem:[%s505 + $0x3] sm:$0xff]
        %v1263 = vld [vmem:[%s505 + $0xb] sm:$0xff]
        %v1264 = vstv %s1261
        %v1265 = vmul.f32 %v1264, %v1262
        %v1266 = vmul.f32 %v1264, %v1263
        %v1267 = vadd.f32 %v1235, %v1265
        %v1268 = vadd.f32 %v1236, %v1266
        %s1269 = sld [smem:[#allocation9 + $0x53]]
        %v1270 = vld [vmem:[%s505 + $0x4] sm:$0xff]
        %v1271 = vld [vmem:[%s505 + $0xc] sm:$0xff]
        %v1272 = vstv %s1269
        %v1273 = vmul.f32 %v1272, %v1270
        %v1274 = vmul.f32 %v1272, %v1271
        %v1275 = vadd.f32 %v1243, %v1273
        %v1276 = vadd.f32 %v1244, %v1274
        %s1277 = sld [smem:[#allocation9 + $0x5a]]
        %v1278 = vld [vmem:[%s505 + $0x5] sm:$0xff]
        %v1279 = vld [vmem:[%s505 + $0xd] sm:$0xff]
        %v1280 = vstv %s1277
        %v1281 = vmul.f32 %v1280, %v1278
        %v1282 = vmul.f32 %v1280, %v1279
        %v1283 = vadd.f32 %v1251, %v1281
        %v1284 = vadd.f32 %v1252, %v1282
        %s1285 = sld [smem:[#allocation9 + $0x61]]
        %v1286 = vld [vmem:[%s505 + $0x6] sm:$0xff]
        %v1287 = vld [vmem:[%s505 + $0xe] sm:$0xff]
        %v1288 = vstv %s1285
        %v1289 = vmul.f32 %v1288, %v1286
        %v1290 = vmul.f32 %v1288, %v1287
        %v1291 = vadd.f32 %v1259, %v1289
        %v1292 = vadd.f32 %v1260, %v1290
        %v1293 = vadd.f32 %v1283, %v1291
        %v1294 = vadd.f32 %v1284, %v1292
        %v1295 = vadd.f32 %v1267, %v1275
        %v1296 = vadd.f32 %v1268, %v1276
        %v1297 = vadd.f32 %v1293, %v1295
        %v1298 = vadd.f32 %v1294, %v1296
        %s1299 = sld [smem:[#allocation4]]
        %v1300 = vstv %s1299
        %v1301 = vadd.f32 %v1297, %v1300
        %v1302 = vadd.f32 %v1298, %v1300
        %v1303 = vxor.u32 %v1301, 2147483648
        %v1304 = vxor.u32 %v1302, 2147483648
        %v1305 = vmul.f32 %v1303, 1.442695
        %v1306 = vpow.pop %v1305
        %v1307 = vmul.f32 %v1304, 1.442695
        %v1308 = vpow.pop %v1307
        %v1309 = vadd.f32 %v1306, 1.0
        %v1310 = vadd.f32 %v1308, 1.0
        %v1311 = vrcp.pop %v1309
        %v1312 = vmul.f32 1.0, %v1311
        %v1313 = vrcp.pop %v1310
        %v1314 = vmul.f32 1.0, %v1313
        %1315 = vst.msk [vmem:[%s203] sm:$0xff] %vm269, %v1312
        %1316 = vst.msk [vmem:[%s203 + $0x8] sm:$0xff] %vm269, %v1314
        %s1317 = sand.u32 %s98, 1
        %s1318 = scalar_lea.sflag [#allocation7], %s1317
        %s1319 = sand.u32 %s98, 1
        %s1320 = smul.addr %s1319, 16
        %s1321 = scalar_lea.vmem [#allocation10], %s1320
        // Predicated region
        $region41: #{tpu_custom_call.1} parent=31 // pred_check
          %p1322 = pneg %p108
        $region42: #{tpu_custom_call.1} parent=31 // pred_check_branch
          %1324 = sbr.rel (%p1322) target = $region44
        $region43: #{tpu_custom_call.1} parent=31 // pred_region
          %s1326 = ssub.s32 256, 256
          %1327 = vsyncadd %s1318, %s1326
          %s1328 = smul.addr %s22, 2
          %s1329 = smul.addr %s1328, 128
          %s1330 = scalar_lea.hbm %s3, %s1329
          %s1331 = sshll.u32 %s1321, 4
          %s1332 = int_to_ptr.vmem [resolvable:$true] %s1331
          %1337 = dma.vmem_to_hbm [thread:$0]  %s1332, 256, %s1330, %s1318, 128, 128, 8
        $region44: #{tpu_custom_call.1} parent=31 // pred_fallthru
          _
      $region32: #{tpu_custom_call.1} parent=5 // pred_fallthru
        _
      %p1338 = scmp.le.s32.totalorder 2, %s17
      // Predicated region
      $region45: #{tpu_custom_call.1} parent=5 // pred_check
        %p1339 = pneg %p1338
      $region46: #{tpu_custom_call.1} parent=5 // pred_check_branch
        %1341 = sbr.rel (%p1339) target = $region48
      $region47: #{tpu_custom_call.1} parent=5 // pred_region
        %s1342 = ssub.s32 %s17, 2
        // Predicated region
        $region49: #{tpu_custom_call.1} parent=47 // pred_check
          %p1343 = pneg %p114
        $region50: #{tpu_custom_call.1} parent=47 // pred_check_branch
          %1345 = sbr.rel (%p1343) target = $region52
        $region51: #{tpu_custom_call.1} parent=47 // pred_region
          %s1346 = sand.u32 %s99, 1
          %s1347 = scalar_lea.sflag [#allocation7], %s1346
          %s1348 = sand.u32 %s99, 1
          %s1349 = smul.addr %s1348, 16
          %s1350 = scalar_lea.vmem [#allocation10], %s1349
          %1351 = dma.done %s1347, 256
        $region52: #{tpu_custom_call.1} parent=47 // pred_fallthru
          _
      $region48: #{tpu_custom_call.1} parent=5 // pred_fallthru
        _
    $region6: #{tpu_custom_call.1} parent=1 // loop_footer
      %s21 = sadd.s32 1, %s17
    $region7: #{tpu_custom_call.1} parent=1 // loop_footer_branch
      %16 = sbr.rel target = $region3
    $region8: #{tpu_custom_call.1} parent=1 // loop_exit
      _
    %1352 = vsyncpa [#allocation6], 1
    %s1353 = scalar_lea.sflag [#allocation6], 1
    %1354 = vsyncpa %s1353, 1
    %1355 = vsyncpa [#allocation7], 1
    %s1356 = scalar_lea.sflag [#allocation7], 1
    %1357 = vsyncpa %s1356, 1
    %1358 = vsyncpa [#allocation8], 1
    %s1359 = scalar_lea.sflag [#allocation8], 1
    %1360 = vsyncpa %s1359, 1

</llo_original>
